<compile_context>
chip_gen: v7x
topology: tpu7x:2x2x1
jax: 0.10.0
libtpu: 0.0.40
codegen_flags: <defaults>
</compile_context>

<pallas_src>
import math
import functools

import jax
import jax.numpy as jnp
from jax.experimental import pallas as pl
from jax.experimental.pallas import tpu as pltpu


def _round_up(x, m):
    return (x + m - 1) // m * m


def _sublane_multiple(dtype):
    # minimum second-minor tile: f32 -> 8, bf16 -> 16, int8/fp8 -> 32
    return max(8, 8 * (4 // jnp.dtype(dtype).itemsize))


def _pick_vocab_tile(V, tv_max, tm, out_bytes):
    """Pick a vocab tile (multiple of 128) balancing vocab padding vs. per-step overhead."""
    # ~0.35 us fixed per grid step at ~1.3 TB/s HBM -> ~4.6e5 "overhead bytes" per step.
    overhead_bytes = 4.6e5
    hi = min(max(tv_max, 128), _round_up(V, 128))
    best, best_score = 128, None
    for cand in range(128, hi + 1, 128):
        Vp = _round_up(V, cand)
        score = Vp * (1.0 + overhead_bytes / float(tm * cand * out_bytes))
        if best_score is None or score < best_score:
            best, best_score = cand, score
    return best


def prepare_albert_mlm_params(params, *, tv=4096, tm=256,
                              matmul_dtype=jnp.bfloat16, out_bytes=4):
    """One-time weight preparation (cast + vocab padding).  Call at model init and
    pass the result to albert_mlm_head so per-call launches do no weight work.

    params = (w1, b1, gamma, beta, w2, bias); weights stored (in_features, out_features),
    i.e. transposed vs. torch.nn.Linear's (out, in) layout.
    """
    w1, b1, gamma, beta, w2, bias = params
    V = w2.shape[1]
    tv_eff = _pick_vocab_tile(V, tv, tm, out_bytes)
    Vp = _round_up(V, tv_eff)

    w2c = w2.astype(matmul_dtype)
    biasc = bias.reshape(1, -1).astype(jnp.float32)
    if Vp != V:
        w2c = jnp.pad(w2c, ((0, 0), (0, Vp - V)))
        biasc = jnp.pad(biasc, ((0, 0), (0, Vp - V)))

    return dict(
        w1=w1.astype(matmul_dtype),
        b1=b1.reshape(1, -1).astype(jnp.float32),
        gamma=gamma.reshape(1, -1).astype(jnp.float32),
        beta=beta.reshape(1, -1).astype(jnp.float32),
        w2=w2c,
        bias=biasc,
        V=V, Vp=Vp, tv=tv_eff,
        matmul_dtype=jnp.dtype(matmul_dtype),
    )


def _mlm_head_kernel(x_ref, w1_ref, b1_ref, gamma_ref, beta_ref,
                     w2_ref, bias_ref, o_ref, h_scr, *, eps, tv, w2_resident):
    # Grid: (token tile i [parallel], vocab tile j [arbitrary / sequential]).
    # The transform depends only on the token tile, so compute it once per i
    # (at j == 0), stash it in VMEM scratch, and reuse it for every vocab tile.
    # This is only valid because the vocab axis is sequential — never "parallel".
    j = pl.program_id(1)

    @pl.when(j == 0)
    def _():
        # MXU matmul with f32 accumulation; gelu / LayerNorm math in f32.
        h = jnp.dot(x_ref[...], w1_ref[...], preferred_element_type=jnp.float32)
        h = h + b1_ref[...]
        # exact (erf-based) gelu, matching the reference implementation
        h = h * 0.5 * (1.0 + jax.lax.erf(h * (1.0 / math.sqrt(2.0))))
        # LayerNorm over the embedding dim (biased variance, eps inside rsqrt).
        # Zero-padded token rows give var=0 -> rsqrt(eps); harmless since (h - mean)=0
        # and padded rows are dropped by the caller.
        mean = jnp.mean(h, axis=-1, keepdims=True)
        var = jnp.mean((h - mean) * (h - mean), axis=-1, keepdims=True)
        h = (h - mean) * jax.lax.rsqrt(var + eps)
        h = h * gamma_ref[...] + beta_ref[...]
        # intentional precision cut: scratch stored in matmul dtype for the decoder
        h_scr[...] = h.astype(h_scr.dtype)

    if w2_resident:
        # W2 / bias are fully VMEM-resident; slice out this vocab tile (128-aligned).
        col = pl.multiple_of(j * tv, tv)
        w2_tile = w2_ref[:, pl.ds(col, tv)]
        b_tile = bias_ref[:, pl.ds(col, tv)]
    else:
        w2_tile = w2_ref[...]
        b_tile = bias_ref[...]

    scores = jnp.dot(h_scr[...], w2_tile, preferred_element_type=jnp.float32)
    o_ref[...] = (scores + b_tile).astype(o_ref.dtype)


def albert_mlm_head(sequence_output, params, *, eps=1e-12, tm=256, tv=4096,
                    matmul_dtype=jnp.bfloat16, out_dtype=jnp.float32,
                    return_padded_vocab=False):
    """sequence_output: (B, S, H) -> prediction_scores (B, S, V) in out_dtype.

    `params` is either the raw 6-tuple (w1, b1, gamma, beta, w2, bias) or the dict
    returned by prepare_albert_mlm_params (preferred: hoists cast/pad out of the
    per-call path).  With return_padded_vocab=True the last dim is the padded Vp
    (padded columns are exactly zero) and no post-call slice copy is made.
    """
    B, S, H = sequence_output.shape

    if isinstance(params, dict):
        prep = params
    else:
        prep = prepare_albert_mlm_params(
            params, tv=tv, tm=tm, matmul_dtype=matmul_dtype,
            out_bytes=jnp.dtype(out_dtype).itemsize)

    matmul_dtype = prep["matmul_dtype"]
    w1c, b1c = prep["w1"], prep["b1"]
    gammac, betac = prep["gamma"], prep["beta"]
    w2c, biasc = prep["w2"], prep["bias"]
    V, Vp, tv_eff = prep["V"], prep["Vp"], prep["tv"]
    E = w1c.shape[1]

    mdt_bytes = jnp.dtype(matmul_dtype).itemsize
    out_bytes = jnp.dtype(out_dtype).itemsize

    # ---- token tiling (sublane-aligned for the matmul dtype) ----
    T = B * S
    sub = _sublane_multiple(matmul_dtype)
    tm_eff = min(_round_up(tm, sub), _round_up(T, sub))
    Tp = _round_up(T, tm_eff)
    # guarantee >= 2 token tiles when possible so the "parallel" axis can feed
    # both v7x TensorCores (harmless on single-TC v5e/v6e)
    if Tp // tm_eff < 2:
        half = tm_eff // 2
        if half >= sub and half % sub == 0 and T > half:
            tm_eff = half
            Tp = _round_up(T, tm_eff)

    x = sequence_output.reshape(T, H).astype(matmul_dtype)
    if Tp != T:
        x = jnp.pad(x, ((0, Tp - T), (0, 0)))

    grid = (Tp // tm_eff, Vp // tv_eff)

    # ---- VMEM budget (generation-aware cap) ----
    try:
        vmem_cap = int(pltpu.get_tpu_info().vmem_capacity_bytes)
    except Exception:  # pragma: no cover - conservative default (v7x size)
        vmem_cap = 64 * 2**20
    vmem_usable = int(vmem_cap * 0.9)

    # Keep the full decoder weight resident in VMEM when it comfortably fits
    # (ALBERT-base bf16 W2 is ~7.5 MB, fine on all generations).
    w2_res_bytes = 2 * (E * Vp * mdt_bytes + Vp * 4)
    w2_resident = w2_res_bytes <= max(16 * 2**20, int(0.4 * vmem_usable))

    vmem_needed = (
        2 * tm_eff * H * mdt_bytes                       # x tiles (double-buffered)
        + 2 * H * E * mdt_bytes                          # W1
        + 2 * 3 * E * 4                                  # b1 / gamma / beta
        + (w2_res_bytes if w2_resident
           else 2 * (E * tv_eff * mdt_bytes + tv_eff * 4))
        + 2 * tm_eff * tv_eff * out_bytes                # output tiles
        + tm_eff * E * mdt_bytes                         # h scratch
    )
    vmem_limit = int(min(max(vmem_needed * 1.3, 32 * 2**20), vmem_usable))

    cost = pl.CostEstimate(
        flops=int(2 * Tp * H * E + 2 * Tp * E * Vp),
        transcendentals=int(Tp * E),
        bytes_accessed=int(Tp * H * mdt_bytes + H * E * mdt_bytes + 3 * E * 4
                           + E * Vp * mdt_bytes + Vp * 4 + Tp * Vp * out_bytes),
    )

    def _run(single_buffer, w2_res):
        def const_spec(shape):
            if single_buffer:
                return pl.BlockSpec(shape, lambda i, j: (0, 0),
                                    pipeline_mode=pl.Buffered(1))
            return pl.BlockSpec(shape, lambda i, j: (0, 0))

        if w2_res:
            w2_spec = const_spec((E, Vp))
            bias_spec = const_spec((1, Vp))
        else:
            w2_spec = pl.BlockSpec((E, tv_eff), lambda i, j: (0, j))
            bias_spec = pl.BlockSpec((1, tv_eff), lambda i, j: (0, j))

        in_specs = [
            pl.BlockSpec((tm_eff, H), lambda i, j: (i, 0)),   # x tile
            const_spec((H, E)),                               # W1 (resident)
            const_spec((1, E)),                               # b1
            const_spec((1, E)),                               # LN gamma
            const_spec((1, E)),                               # LN beta
            w2_spec,                                          # decoder W2
            bias_spec,                                        # vocab bias
        ]

        kernel = functools.partial(_mlm_head_kernel, eps=eps, tv=tv_eff,
                                   w2_resident=w2_res)
        return pl.pallas_call(
            kernel,
            out_shape=jax.ShapeDtypeStruct((Tp, Vp), out_dtype),
            grid_spec=pltpu.PrefetchScalarGridSpec(
                num_scalar_prefetch=0,
                grid=grid,
                in_specs=in_specs,
                out_specs=pl.BlockSpec((tm_eff, tv_eff), lambda i, j: (i, j)),
                scratch_shapes=[pltpu.VMEM((tm_eff, E), matmul_dtype)],
            ),
            compiler_params=pltpu.CompilerParams(
                # token axis parallel (v7x megacore); vocab axis MUST stay sequential
                # because h_scr is reused across vocab tiles.
                dimension_semantics=("parallel", "arbitrary"),
                vmem_limit_bytes=vmem_limit,
            ),
            cost_estimate=cost,
        )(x, w1c, b1c, gammac, betac, w2c, biasc)

    # Preferred config first; fall back gracefully if this jax build rejects
    # single-buffering or the resident-W2 in-kernel slice.  (Only effective when
    # called eagerly — errors under jax.jit surface outside this function.)
    attempts = (
        dict(single_buffer=True, w2_res=w2_resident),
        dict(single_buffer=False, w2_res=w2_resident),
        dict(single_buffer=False, w2_res=False),
    )
    last_err = None
    out = None
    for cfg in attempts:
        try:
            out = _run(**cfg)
            break
        except Exception as e:  # noqa: BLE001 - retry with a more conservative config
            last_err = e
    if out is None:
        raise last_err

    # Only slice when padding actually exists (the slice is a full HBM copy).
    v_keep = Vp if return_padded_vocab else V
    if Tp != T or v_keep != Vp:
        out = out[:T, :v_keep]
    return out.reshape(B, S, v_keep)


def _reference(sequence_output, params, eps=1e-12):
    # Pure f32 reference mirroring the PyTorch module.
    w1, b1, gamma, beta, w2, bias = params
    h = sequence_output @ w1 + b1[0]
    h = h * 0.5 * (1.0 + jax.lax.erf(h / jnp.sqrt(2.0)))
    mean = jnp.mean(h, axis=-1, keepdims=True)
    var = jnp.mean((h - mean) ** 2, axis=-1, keepdims=True)
    h = (h - mean) / jnp.sqrt(var + eps) * gamma[0] + beta[0]
    return h @ w2 + bias[0]


if __name__ == "__main__":
    # Small ALBert-like config
    B, S = 2, 8
    hidden_size = 32
    embedding_size = 32
    vocab_size = 256
    eps = 1e-12

    key = jax.random.PRNGKey(0)
    k1, k2, k3, k4, k5, k6, k7 = jax.random.split(key, 7)

    # deterministic synthetic parameters (not a checkpoint load)
    w1 = jax.random.normal(k1, (hidden_size, embedding_size), jnp.float32) * 0.02
    b1 = jax.random.normal(k4, (1, embedding_size), jnp.float32) * 0.1
    gamma = 1.0 + jax.random.normal(k5, (1, embedding_size), jnp.float32) * 0.1
    beta = jax.random.normal(k6, (1, embedding_size), jnp.float32) * 0.1
    w2 = jax.random.normal(k2, (embedding_size, vocab_size), jnp.float32) * 0.02
    bias = jax.random.normal(k7, (1, vocab_size), jnp.float32) * 0.1
    params = (w1, b1, gamma, beta, w2, bias)

    sequence_output = jax.random.normal(k3, (B, S, hidden_size), jnp.float32)

    ref = _reference(sequence_output, params, eps=eps)

    # 1) exact-math path (f32 matmuls) — tight tolerance vs. f32 reference
    scores_f32 = albert_mlm_head(sequence_output, params, eps=eps,
                                 matmul_dtype=jnp.float32)
    scores_f32 = jax.block_until_ready(scores_f32)
    assert scores_f32.shape == (B, S, vocab_size)
    assert jnp.allclose(scores_f32, ref, atol=1e-4, rtol=1e-4), "f32 kernel mismatch"

    # 2) optimized path (bf16 operands, f32 accumulation) with hoisted weight prep
    prepared = prepare_albert_mlm_params(params, matmul_dtype=jnp.bfloat16)
    scores = albert_mlm_head(sequence_output, prepared, eps=eps)
    scores = jax.block_until_ready(scores)
    assert scores.shape == (B, S, vocab_size)
    assert jnp.allclose(scores, ref, atol=3e-2, rtol=3e-2), "bf16 kernel mismatch"

    print("KERNEL_OK")
</pallas_src>

<mosaic_0001>
module attributes {stable_mosaic.version = 11 : i64} {
  func.func @_mlm_head_kernel(%arg0: i32, %arg1: i32, %arg2: memref<8x32xf32, #tpu.memory_space<vmem>>, %arg3: memref<32x32xf32, #tpu.memory_space<vmem>>, %arg4: memref<1x32xf32, #tpu.memory_space<vmem>>, %arg5: memref<1x32xf32, #tpu.memory_space<vmem>>, %arg6: memref<1x32xf32, #tpu.memory_space<vmem>>, %arg7: memref<32x256xf32, #tpu.memory_space<vmem>>, %arg8: memref<1x256xf32, #tpu.memory_space<vmem>>, %arg9: memref<8x256xf32, #tpu.memory_space<vmem>>, %arg10: memref<8x32xf32, #tpu.memory_space<vmem>>) attributes {dimension_semantics = [#tpu.dimension_semantics<parallel>, #tpu.dimension_semantics<arbitrary>], iteration_bounds = array<i64: 2, 1>, scalar_prefetch = 0 : i64, scratch_operands = 1 : i64, tpu.core_type = #tpu.core_type<tc>, window_params = [{transform_indices = @transform_0, window_bounds = array<i64: 8, 32>}, {pipeline_mode = #tpu.pipeline_mode<synchronous>, transform_indices = @transform_1, window_bounds = array<i64: 32, 32>}, {pipeline_mode = #tpu.pipeline_mode<synchronous>, transform_indices = @transform_2, window_bounds = array<i64: 1, 32>}, {pipeline_mode = #tpu.pipeline_mode<synchronous>, transform_indices = @transform_3, window_bounds = array<i64: 1, 32>}, {pipeline_mode = #tpu.pipeline_mode<synchronous>, transform_indices = @transform_4, window_bounds = array<i64: 1, 32>}, {pipeline_mode = #tpu.pipeline_mode<synchronous>, transform_indices = @transform_5, window_bounds = array<i64: 32, 256>}, {pipeline_mode = #tpu.pipeline_mode<synchronous>, transform_indices = @transform_6, window_bounds = array<i64: 1, 256>}, {transform_indices = @transform_7, window_bounds = array<i64: 8, 256>}]} {
    %c0_i32 = arith.constant 0 : i32
    %0 = arith.cmpi eq, %arg1, %c0_i32 : i32
    %1 = arith.extui %0 : i1 to i32
    %c0_i32_0 = arith.constant 0 : i32
    %2 = arith.cmpi ne, %1, %c0_i32_0 : i32
    scf.if %2 {
      %c0_6 = arith.constant 0 : index
      %c0_7 = arith.constant 0 : index
      %14 = vector.load %arg2[%c0_6, %c0_7] : memref<8x32xf32, #tpu.memory_space<vmem>>, vector<8x32xf32>
      %c0_8 = arith.constant 0 : index
      %c0_9 = arith.constant 0 : index
      %15 = vector.load %arg3[%c0_8, %c0_9] : memref<32x32xf32, #tpu.memory_space<vmem>>, vector<32x32xf32>
      %cst_10 = arith.constant dense<0.000000e+00> : vector<8x32xf32>
      %16 = tpu.matmul %14, %15, %cst_10 {dimension_numbers = #tpu.dot_dimension_numbers<[1], [0], [0], [1], [0, 0, 1, 1], [], []>} : vector<8x32xf32>, vector<32x32xf32>, vector<8x32xf32> -> vector<8x32xf32>
      %c0_11 = arith.constant 0 : index
      %c0_12 = arith.constant 0 : index
      %17 = vector.load %arg4[%c0_11, %c0_12] : memref<1x32xf32, #tpu.memory_space<vmem>>, vector<1x32xf32>
      %18 = vector.broadcast %17 : vector<1x32xf32> to vector<8x32xf32>
      %19 = arith.addf %16, %18 : vector<8x32xf32>
      %cst_13 = arith.constant 5.000000e-01 : f32
      %20 = vector.broadcast %cst_13 : f32 to vector<8x32xf32>
      %21 = arith.mulf %19, %20 : vector<8x32xf32>
      %cst_14 = arith.constant 0.707106769 : f32
      %22 = vector.broadcast %cst_14 : f32 to vector<8x32xf32>
      %23 = arith.mulf %19, %22 : vector<8x32xf32>
      %24 = math.erf %23 : vector<8x32xf32>
      %cst_15 = arith.constant 1.000000e+00 : f32
      %25 = vector.broadcast %cst_15 : f32 to vector<8x32xf32>
      %26 = arith.addf %25, %24 : vector<8x32xf32>
      %27 = arith.mulf %21, %26 : vector<8x32xf32>
      %cst_16 = arith.constant dense<0.000000e+00> : vector<8xf32>
      %28 = vector.multi_reduction <add>, %27, %cst_16 [1] : vector<8x32xf32> to vector<8xf32>
      %29 = vector.shape_cast %28 : vector<8xf32> to vector<8x1xf32>
      %cst_17 = arith.constant 3.200000e+01 : f32
      %30 = vector.broadcast %cst_17 : f32 to vector<8x1xf32>
      %31 = arith.divf %29, %30 : vector<8x1xf32>
      %32 = vector.broadcast %31 : vector<8x1xf32> to vector<8x32xf32>
      %33 = arith.subf %27, %32 : vector<8x32xf32>
      %34 = vector.broadcast %31 : vector<8x1xf32> to vector<8x32xf32>
      %35 = arith.subf %27, %34 : vector<8x32xf32>
      %36 = arith.mulf %33, %35 : vector<8x32xf32>
      %cst_18 = arith.constant dense<0.000000e+00> : vector<8xf32>
      %37 = vector.multi_reduction <add>, %36, %cst_18 [1] : vector<8x32xf32> to vector<8xf32>
      %38 = vector.shape_cast %37 : vector<8xf32> to vector<8x1xf32>
      %cst_19 = arith.constant 3.200000e+01 : f32
      %39 = vector.broadcast %cst_19 : f32 to vector<8x1xf32>
      %40 = arith.divf %38, %39 : vector<8x1xf32>
      %41 = vector.broadcast %31 : vector<8x1xf32> to vector<8x32xf32>
      %42 = arith.subf %27, %41 : vector<8x32xf32>
      %cst_20 = arith.constant 9.99999996E-13 : f32
      %43 = vector.broadcast %cst_20 : f32 to vector<8x1xf32>
      %44 = arith.addf %40, %43 : vector<8x1xf32>
      %45 = math.rsqrt %44 : vector<8x1xf32>
      %46 = vector.broadcast %45 : vector<8x1xf32> to vector<8x32xf32>
      %47 = arith.mulf %42, %46 : vector<8x32xf32>
      %c0_21 = arith.constant 0 : index
      %c0_22 = arith.constant 0 : index
      %48 = vector.load %arg5[%c0_21, %c0_22] : memref<1x32xf32, #tpu.memory_space<vmem>>, vector<1x32xf32>
      %49 = vector.broadcast %48 : vector<1x32xf32> to vector<8x32xf32>
      %50 = arith.mulf %47, %49 : vector<8x32xf32>
      %c0_23 = arith.constant 0 : index
      %c0_24 = arith.constant 0 : index
      %51 = vector.load %arg6[%c0_23, %c0_24] : memref<1x32xf32, #tpu.memory_space<vmem>>, vector<1x32xf32>
      %52 = vector.broadcast %51 : vector<1x32xf32> to vector<8x32xf32>
      %53 = arith.addf %50, %52 : vector<8x32xf32>
      %c0_25 = arith.constant 0 : index
      %c0_26 = arith.constant 0 : index
      %54 = vector.load %arg10[%c0_25, %c0_26] : memref<8x32xf32, #tpu.memory_space<vmem>>, vector<8x32xf32>
      tpu.vector_store %arg10[%c0_25, %c0_26], %53 {strides = array<i32>} : memref<8x32xf32, #tpu.memory_space<vmem>>, vector<8x32xf32>,
    } else {
    }
    %c256_i32 = arith.constant 256 : i32
    %3 = arith.muli %arg1, %c256_i32 : i32
    %4 = tpu.assume_multiple %3, 256 : i32
    %c0 = arith.constant 0 : index
    %5 = arith.index_cast %4 : i32 to index
    %6 = vector.load %arg7[%c0, %5] : memref<32x256xf32, #tpu.memory_space<vmem>>, vector<32x256xf32>
    %c0_1 = arith.constant 0 : index
    %7 = arith.index_cast %4 : i32 to index
    %8 = vector.load %arg8[%c0_1, %7] : memref<1x256xf32, #tpu.memory_space<vmem>>, vector<1x256xf32>
    %c0_2 = arith.constant 0 : index
    %c0_3 = arith.constant 0 : index
    %9 = vector.load %arg10[%c0_2, %c0_3] : memref<8x32xf32, #tpu.memory_space<vmem>>, vector<8x32xf32>
    %cst = arith.constant dense<0.000000e+00> : vector<8x256xf32>
    %10 = tpu.matmul %9, %6, %cst {dimension_numbers = #tpu.dot_dimension_numbers<[1], [0], [0], [1], [0, 0, 1, 1], [], []>} : vector<8x32xf32>, vector<32x256xf32>, vector<8x256xf32> -> vector<8x256xf32>
    %11 = vector.broadcast %8 : vector<1x256xf32> to vector<8x256xf32>
    %12 = arith.addf %10, %11 : vector<8x256xf32>
    %c0_4 = arith.constant 0 : index
    %c0_5 = arith.constant 0 : index
    %13 = vector.load %arg9[%c0_4, %c0_5] : memref<8x256xf32, #tpu.memory_space<vmem>>, vector<8x256xf32>
    tpu.vector_store %arg9[%c0_4, %c0_5], %12 {strides = array<i32>} : memref<8x256xf32, #tpu.memory_space<vmem>>, vector<8x256xf32>,
    return
  }
  func.func @transform_0(%arg0: i32, %arg1: i32) -> (i32, i32) {
    %c0_i32 = arith.constant 0 : i32
    %c0_i32_0 = arith.constant 0 : i32
    return %arg0, %c0_i32 : i32, i32
  }
  func.func @transform_1(%arg0: i32, %arg1: i32) -> (i32, i32) {
    %c0_i32 = arith.constant 0 : i32
    %c0_i32_0 = arith.constant 0 : i32
    %c0_i32_1 = arith.constant 0 : i32
    return %c0_i32, %c0_i32_0 : i32, i32
  }
  func.func @transform_2(%arg0: i32, %arg1: i32) -> (i32, i32) {
    %c0_i32 = arith.constant 0 : i32
    %c0_i32_0 = arith.constant 0 : i32
    %c0_i32_1 = arith.constant 0 : i32
    return %c0_i32, %c0_i32_0 : i32, i32
  }
  func.func @transform_3(%arg0: i32, %arg1: i32) -> (i32, i32) {
    %c0_i32 = arith.constant 0 : i32
    %c0_i32_0 = arith.constant 0 : i32
    %c0_i32_1 = arith.constant 0 : i32
    return %c0_i32, %c0_i32_0 : i32, i32
  }
  func.func @transform_4(%arg0: i32, %arg1: i32) -> (i32, i32) {
    %c0_i32 = arith.constant 0 : i32
    %c0_i32_0 = arith.constant 0 : i32
    %c0_i32_1 = arith.constant 0 : i32
    return %c0_i32, %c0_i32_0 : i32, i32
  }
  func.func @transform_5(%arg0: i32, %arg1: i32) -> (i32, i32) {
    %c0_i32 = arith.constant 0 : i32
    %c0_i32_0 = arith.constant 0 : i32
    %c0_i32_1 = arith.constant 0 : i32
    return %c0_i32, %c0_i32_0 : i32, i32
  }
  func.func @transform_6(%arg0: i32, %arg1: i32) -> (i32, i32) {
    %c0_i32 = arith.constant 0 : i32
    %c0_i32_0 = arith.constant 0 : i32
    %c0_i32_1 = arith.constant 0 : i32
    return %c0_i32, %c0_i32_0 : i32, i32
  }
  func.func @transform_7(%arg0: i32, %arg1: i32) -> (i32, i32) {
    %c0_i32 = arith.constant 0 : i32
    return %arg0, %arg1 : i32, i32
  }
}

module attributes {stable_mosaic.version = 11 : i64} {
  func.func @_mlm_head_kernel(%arg0: i32, %arg1: i32, %arg2: memref<8x32xf32, #tpu.memory_space<vmem>>, %arg3: memref<32x32xf32, #tpu.memory_space<vmem>>, %arg4: memref<1x32xf32, #tpu.memory_space<vmem>>, %arg5: memref<1x32xf32, #tpu.memory_space<vmem>>, %arg6: memref<1x32xf32, #tpu.memory_space<vmem>>, %arg7: memref<32x256xf32, #tpu.memory_space<vmem>>, %arg8: memref<1x256xf32, #tpu.memory_space<vmem>>, %arg9: memref<8x256xf32, #tpu.memory_space<vmem>>, %arg10: memref<8x32xf32, #tpu.memory_space<vmem>>) attributes {dimension_semantics = [#tpu.dimension_semantics<parallel>, #tpu.dimension_semantics<arbitrary>], iteration_bounds = array<i64: 2, 1>, scalar_prefetch = 0 : i64, scratch_operands = 1 : i64, tpu.core_type = #tpu.core_type<tc>, window_params = [{transform_indices = @transform_0, window_bounds = array<i64: 8, 32>}, {pipeline_mode = #tpu.pipeline_mode<synchronous>, transform_indices = @transform_1, window_bounds = array<i64: 32, 32>}, {pipeline_mode = #tpu.pipeline_mode<synchronous>, transform_indices = @transform_2, window_bounds = array<i64: 1, 32>}, {pipeline_mode = #tpu.pipeline_mode<synchronous>, transform_indices = @transform_3, window_bounds = array<i64: 1, 32>}, {pipeline_mode = #tpu.pipeline_mode<synchronous>, transform_indices = @transform_4, window_bounds = array<i64: 1, 32>}, {pipeline_mode = #tpu.pipeline_mode<synchronous>, transform_indices = @transform_5, window_bounds = array<i64: 32, 256>}, {pipeline_mode = #tpu.pipeline_mode<synchronous>, transform_indices = @transform_6, window_bounds = array<i64: 1, 256>}, {transform_indices = @transform_7, window_bounds = array<i64: 8, 256>}]} {
    %c0_i32 = arith.constant 0 : i32
    %0 = arith.cmpi eq, %arg1, %c0_i32 : i32
    %1 = arith.extui %0 : i1 to i32
    %c0_i32_0 = arith.constant 0 : i32
    %2 = arith.cmpi ne, %1, %c0_i32_0 : i32
    scf.if %2 {
      %c0_6 = arith.constant 0 : index
      %c0_7 = arith.constant 0 : index
      %14 = vector.load %arg2[%c0_6, %c0_7] : memref<8x32xf32, #tpu.memory_space<vmem>>, vector<8x32xf32>
      %c0_8 = arith.constant 0 : index
      %c0_9 = arith.constant 0 : index
      %15 = vector.load %arg3[%c0_8, %c0_9] : memref<32x32xf32, #tpu.memory_space<vmem>>, vector<32x32xf32>
      %cst_10 = arith.constant dense<0.000000e+00> : vector<8x32xf32>
      %16 = tpu.matmul %14, %15, %cst_10 {dimension_numbers = #tpu.dot_dimension_numbers<[1], [0], [0], [1], [0, 0, 1, 1], [], []>} : vector<8x32xf32>, vector<32x32xf32>, vector<8x32xf32> -> vector<8x32xf32>
      %c0_11 = arith.constant 0 : index
      %c0_12 = arith.constant 0 : index
      %17 = vector.load %arg4[%c0_11, %c0_12] : memref<1x32xf32, #tpu.memory_space<vmem>>, vector<1x32xf32>
      %18 = vector.broadcast %17 : vector<1x32xf32> to vector<8x32xf32>
      %19 = arith.addf %16, %18 : vector<8x32xf32>
      %cst_13 = arith.constant 5.000000e-01 : f32
      %20 = vector.broadcast %cst_13 : f32 to vector<8x32xf32>
      %21 = arith.mulf %19, %20 : vector<8x32xf32>
      %cst_14 = arith.constant 0.707106769 : f32
      %22 = vector.broadcast %cst_14 : f32 to vector<8x32xf32>
      %23 = arith.mulf %19, %22 : vector<8x32xf32>
      %24 = math.erf %23 : vector<8x32xf32>
      %cst_15 = arith.constant 1.000000e+00 : f32
      %25 = vector.broadcast %cst_15 : f32 to vector<8x32xf32>
      %26 = arith.addf %25, %24 : vector<8x32xf32>
      %27 = arith.mulf %21, %26 : vector<8x32xf32>
      %cst_16 = arith.constant dense<0.000000e+00> : vector<8xf32>
      %28 = vector.multi_reduction <add>, %27, %cst_16 [1] : vector<8x32xf32> to vector<8xf32>
      %29 = vector.shape_cast %28 : vector<8xf32> to vector<8x1xf32>
      %cst_17 = arith.constant 3.200000e+01 : f32
      %30 = vector.broadcast %cst_17 : f32 to vector<8x1xf32>
      %31 = arith.divf %29, %30 : vector<8x1xf32>
      %32 = vector.broadcast %31 : vector<8x1xf32> to vector<8x32xf32>
      %33 = arith.subf %27, %32 : vector<8x32xf32>
      %34 = vector.broadcast %31 : vector<8x1xf32> to vector<8x32xf32>
      %35 = arith.subf %27, %34 : vector<8x32xf32>
      %36 = arith.mulf %33, %35 : vector<8x32xf32>
      %cst_18 = arith.constant dense<0.000000e+00> : vector<8xf32>
      %37 = vector.multi_reduction <add>, %36, %cst_18 [1] : vector<8x32xf32> to vector<8xf32>
      %38 = vector.shape_cast %37 : vector<8xf32> to vector<8x1xf32>
      %cst_19 = arith.constant 3.200000e+01 : f32
      %39 = vector.broadcast %cst_19 : f32 to vector<8x1xf32>
      %40 = arith.divf %38, %39 : vector<8x1xf32>
      %41 = vector.broadcast %31 : vector<8x1xf32> to vector<8x32xf32>
      %42 = arith.subf %27, %41 : vector<8x32xf32>
      %cst_20 = arith.constant 9.99999996E-13 : f32
      %43 = vector.broadcast %cst_20 : f32 to vector<8x1xf32>
      %44 = arith.addf %40, %43 : vector<8x1xf32>
      %45 = math.rsqrt %44 : vector<8x1xf32>
      %46 = vector.broadcast %45 : vector<8x1xf32> to vector<8x32xf32>
      %47 = arith.mulf %42, %46 : vector<8x32xf32>
      %c0_21 = arith.constant 0 : index
      %c0_22 = arith.constant 0 : index
      %48 = vector.load %arg5[%c0_21, %c0_22] : memref<1x32xf32, #tpu.memory_space<vmem>>, vector<1x32xf32>
      %49 = vector.broadcast %48 : vector<1x32xf32> to vector<8x32xf32>
      %50 = arith.mulf %47, %49 : vector<8x32xf32>
      %c0_23 = arith.constant 0 : index
      %c0_24 = arith.constant 0 : index
      %51 = vector.load %arg6[%c0_23, %c0_24] : memref<1x32xf32, #tpu.memory_space<vmem>>, vector<1x32xf32>
      %52 = vector.broadcast %51 : vector<1x32xf32> to vector<8x32xf32>
      %53 = arith.addf %50, %52 : vector<8x32xf32>
      %c0_25 = arith.constant 0 : index
      %c0_26 = arith.constant 0 : index
      %54 = vector.load %arg10[%c0_25, %c0_26] : memref<8x32xf32, #tpu.memory_space<vmem>>, vector<8x32xf32>
      tpu.vector_store %arg10[%c0_25, %c0_26], %53 {strides = array<i32>} : memref<8x32xf32, #tpu.memory_space<vmem>>, vector<8x32xf32>,
    } else {
    }
    %c256_i32 = arith.constant 256 : i32
    %3 = arith.muli %arg1, %c256_i32 : i32
    %4 = tpu.assume_multiple %3, 256 : i32
    %c0 = arith.constant 0 : index
    %5 = arith.index_cast %4 : i32 to index
    %6 = vector.load %arg7[%c0, %5] : memref<32x256xf32, #tpu.memory_space<vmem>>, vector<32x256xf32>
    %c0_1 = arith.constant 0 : index
    %7 = arith.index_cast %4 : i32 to index
    %8 = vector.load %arg8[%c0_1, %7] : memref<1x256xf32, #tpu.memory_space<vmem>>, vector<1x256xf32>
    %c0_2 = arith.constant 0 : index
    %c0_3 = arith.constant 0 : index
    %9 = vector.load %arg10[%c0_2, %c0_3] : memref<8x32xf32, #tpu.memory_space<vmem>>, vector<8x32xf32>
    %cst = arith.constant dense<0.000000e+00> : vector<8x256xf32>
    %10 = tpu.matmul %9, %6, %cst {dimension_numbers = #tpu.dot_dimension_numbers<[1], [0], [0], [1], [0, 0, 1, 1], [], []>} : vector<8x32xf32>, vector<32x256xf32>, vector<8x256xf32> -> vector<8x256xf32>
    %11 = vector.broadcast %8 : vector<1x256xf32> to vector<8x256xf32>
    %12 = arith.addf %10, %11 : vector<8x256xf32>
    %c0_4 = arith.constant 0 : index
    %c0_5 = arith.constant 0 : index
    %13 = vector.load %arg9[%c0_4, %c0_5] : memref<8x256xf32, #tpu.memory_space<vmem>>, vector<8x256xf32>
    tpu.vector_store %arg9[%c0_4, %c0_5], %12 {strides = array<i32>} : memref<8x256xf32, #tpu.memory_space<vmem>>, vector<8x256xf32>,
    return
  }
  func.func @transform_0(%arg0: i32, %arg1: i32) -> (i32, i32) {
    %c0_i32 = arith.constant 0 : i32
    %c0_i32_0 = arith.constant 0 : i32
    return %arg0, %c0_i32 : i32, i32
  }
  func.func @transform_1(%arg0: i32, %arg1: i32) -> (i32, i32) {
    %c0_i32 = arith.constant 0 : i32
    %c0_i32_0 = arith.constant 0 : i32
    %c0_i32_1 = arith.constant 0 : i32
    return %c0_i32, %c0_i32_0 : i32, i32
  }
  func.func @transform_2(%arg0: i32, %arg1: i32) -> (i32, i32) {
    %c0_i32 = arith.constant 0 : i32
    %c0_i32_0 = arith.constant 0 : i32
    %c0_i32_1 = arith.constant 0 : i32
    return %c0_i32, %c0_i32_0 : i32, i32
  }
  func.func @transform_3(%arg0: i32, %arg1: i32) -> (i32, i32) {
    %c0_i32 = arith.constant 0 : i32
    %c0_i32_0 = arith.constant 0 : i32
    %c0_i32_1 = arith.constant 0 : i32
    return %c0_i32, %c0_i32_0 : i32, i32
  }
  func.func @transform_4(%arg0: i32, %arg1: i32) -> (i32, i32) {
    %c0_i32 = arith.constant 0 : i32
    %c0_i32_0 = arith.constant 0 : i32
    %c0_i32_1 = arith.constant 0 : i32
    return %c0_i32, %c0_i32_0 : i32, i32
  }
  func.func @transform_5(%arg0: i32, %arg1: i32) -> (i32, i32) {
    %c0_i32 = arith.constant 0 : i32
    %c0_i32_0 = arith.constant 0 : i32
    %c0_i32_1 = arith.constant 0 : i32
    return %c0_i32, %c0_i32_0 : i32, i32
  }
  func.func @transform_6(%arg0: i32, %arg1: i32) -> (i32, i32) {
    %c0_i32 = arith.constant 0 : i32
    %c0_i32_0 = arith.constant 0 : i32
    %c0_i32_1 = arith.constant 0 : i32
    return %c0_i32, %c0_i32_0 : i32, i32
  }
  func.func @transform_7(%arg0: i32, %arg1: i32) -> (i32, i32) {
    %c0_i32 = arith.constant 0 : i32
    return %arg0, %arg1 : i32, i32
  }
}

module attributes {stable_mosaic.version = 11 : i64} {
  func.func @_mlm_head_kernel(%arg0: i32, %arg1: i32, %arg2: memref<8x32xf32, #tpu.memory_space<vmem>>, %arg3: memref<32x32xf32, #tpu.memory_space<vmem>>, %arg4: memref<1x32xf32, #tpu.memory_space<vmem>>, %arg5: memref<1x32xf32, #tpu.memory_space<vmem>>, %arg6: memref<1x32xf32, #tpu.memory_space<vmem>>, %arg7: memref<32x256xf32, #tpu.memory_space<vmem>>, %arg8: memref<1x256xf32, #tpu.memory_space<vmem>>, %arg9: memref<8x256xf32, #tpu.memory_space<vmem>>, %arg10: memref<8x32xf32, #tpu.memory_space<vmem>>) attributes {dimension_semantics = [#tpu.dimension_semantics<parallel>, #tpu.dimension_semantics<arbitrary>], iteration_bounds = array<i64: 2, 1>, scalar_prefetch = 0 : i64, scratch_operands = 1 : i64, tpu.core_type = #tpu.core_type<tc>, window_params = [{transform_indices = @transform_0, window_bounds = array<i64: 8, 32>}, {pipeline_mode = #tpu.pipeline_mode<synchronous>, transform_indices = @transform_1, window_bounds = array<i64: 32, 32>}, {pipeline_mode = #tpu.pipeline_mode<synchronous>, transform_indices = @transform_2, window_bounds = array<i64: 1, 32>}, {pipeline_mode = #tpu.pipeline_mode<synchronous>, transform_indices = @transform_3, window_bounds = array<i64: 1, 32>}, {pipeline_mode = #tpu.pipeline_mode<synchronous>, transform_indices = @transform_4, window_bounds = array<i64: 1, 32>}, {transform_indices = @transform_5, window_bounds = array<i64: 32, 256>}, {transform_indices = @transform_6, window_bounds = array<i64: 1, 256>}, {transform_indices = @transform_7, window_bounds = array<i64: 8, 256>}]} {
    %c0_i32 = arith.constant 0 : i32
    %0 = arith.cmpi eq, %arg1, %c0_i32 : i32
    %1 = arith.extui %0 : i1 to i32
    %c0_i32_0 = arith.constant 0 : i32
    %2 = arith.cmpi ne, %1, %c0_i32_0 : i32
    scf.if %2 {
      %c0_8 = arith.constant 0 : index
      %c0_9 = arith.constant 0 : index
      %10 = vector.load %arg2[%c0_8, %c0_9] : memref<8x32xf32, #tpu.memory_space<vmem>>, vector<8x32xf32>
      %c0_10 = arith.constant 0 : index
      %c0_11 = arith.constant 0 : index
      %11 = vector.load %arg3[%c0_10, %c0_11] : memref<32x32xf32, #tpu.memory_space<vmem>>, vector<32x32xf32>
      %cst_12 = arith.constant dense<0.000000e+00> : vector<8x32xf32>
      %12 = tpu.matmul %10, %11, %cst_12 {dimension_numbers = #tpu.dot_dimension_numbers<[1], [0], [0], [1], [0, 0, 1, 1], [], []>} : vector<8x32xf32>, vector<32x32xf32>, vector<8x32xf32> -> vector<8x32xf32>
      %c0_13 = arith.constant 0 : index
      %c0_14 = arith.constant 0 : index
      %13 = vector.load %arg4[%c0_13, %c0_14] : memref<1x32xf32, #tpu.memory_space<vmem>>, vector<1x32xf32>
      %14 = vector.broadcast %13 : vector<1x32xf32> to vector<8x32xf32>
      %15 = arith.addf %12, %14 : vector<8x32xf32>
      %cst_15 = arith.constant 5.000000e-01 : f32
      %16 = vector.broadcast %cst_15 : f32 to vector<8x32xf32>
      %17 = arith.mulf %15, %16 : vector<8x32xf32>
      %cst_16 = arith.constant 0.707106769 : f32
      %18 = vector.broadcast %cst_16 : f32 to vector<8x32xf32>
      %19 = arith.mulf %15, %18 : vector<8x32xf32>
      %20 = math.erf %19 : vector<8x32xf32>
      %cst_17 = arith.constant 1.000000e+00 : f32
      %21 = vector.broadcast %cst_17 : f32 to vector<8x32xf32>
      %22 = arith.addf %21, %20 : vector<8x32xf32>
      %23 = arith.mulf %17, %22 : vector<8x32xf32>
      %cst_18 = arith.constant dense<0.000000e+00> : vector<8xf32>
      %24 = vector.multi_reduction <add>, %23, %cst_18 [1] : vector<8x32xf32> to vector<8xf32>
      %25 = vector.shape_cast %24 : vector<8xf32> to vector<8x1xf32>
      %cst_19 = arith.constant 3.200000e+01 : f32
      %26 = vector.broadcast %cst_19 : f32 to vector<8x1xf32>
      %27 = arith.divf %25, %26 : vector<8x1xf32>
      %28 = vector.broadcast %27 : vector<8x1xf32> to vector<8x32xf32>
      %29 = arith.subf %23, %28 : vector<8x32xf32>
      %30 = vector.broadcast %27 : vector<8x1xf32> to vector<8x32xf32>
      %31 = arith.subf %23, %30 : vector<8x32xf32>
      %32 = arith.mulf %29, %31 : vector<8x32xf32>
      %cst_20 = arith.constant dense<0.000000e+00> : vector<8xf32>
      %33 = vector.multi_reduction <add>, %32, %cst_20 [1] : vector<8x32xf32> to vector<8xf32>
      %34 = vector.shape_cast %33 : vector<8xf32> to vector<8x1xf32>
      %cst_21 = arith.constant 3.200000e+01 : f32
      %35 = vector.broadcast %cst_21 : f32 to vector<8x1xf32>
      %36 = arith.divf %34, %35 : vector<8x1xf32>
      %37 = vector.broadcast %27 : vector<8x1xf32> to vector<8x32xf32>
      %38 = arith.subf %23, %37 : vector<8x32xf32>
      %cst_22 = arith.constant 9.99999996E-13 : f32
      %39 = vector.broadcast %cst_22 : f32 to vector<8x1xf32>
      %40 = arith.addf %36, %39 : vector<8x1xf32>
      %41 = math.rsqrt %40 : vector<8x1xf32>
      %42 = vector.broadcast %41 : vector<8x1xf32> to vector<8x32xf32>
      %43 = arith.mulf %38, %42 : vector<8x32xf32>
      %c0_23 = arith.constant 0 : index
      %c0_24 = arith.constant 0 : index
      %44 = vector.load %arg5[%c0_23, %c0_24] : memref<1x32xf32, #tpu.memory_space<vmem>>, vector<1x32xf32>
      %45 = vector.broadcast %44 : vector<1x32xf32> to vector<8x32xf32>
      %46 = arith.mulf %43, %45 : vector<8x32xf32>
      %c0_25 = arith.constant 0 : index
      %c0_26 = arith.constant 0 : index
      %47 = vector.load %arg6[%c0_25, %c0_26] : memref<1x32xf32, #tpu.memory_space<vmem>>, vector<1x32xf32>
      %48 = vector.broadcast %47 : vector<1x32xf32> to vector<8x32xf32>
      %49 = arith.addf %46, %48 : vector<8x32xf32>
      %c0_27 = arith.constant 0 : index
      %c0_28 = arith.constant 0 : index
      %50 = vector.load %arg10[%c0_27, %c0_28] : memref<8x32xf32, #tpu.memory_space<vmem>>, vector<8x32xf32>
      tpu.vector_store %arg10[%c0_27, %c0_28], %49 {strides = array<i32>} : memref<8x32xf32, #tpu.memory_space<vmem>>, vector<8x32xf32>,
    } else {
    }
    %c0 = arith.constant 0 : index
    %c0_1 = arith.constant 0 : index
    %3 = vector.load %arg7[%c0, %c0_1] : memref<32x256xf32, #tpu.memory_space<vmem>>, vector<32x256xf32>
    %c0_2 = arith.constant 0 : index
    %c0_3 = arith.constant 0 : index
    %4 = vector.load %arg8[%c0_2, %c0_3] : memref<1x256xf32, #tpu.memory_space<vmem>>, vector<1x256xf32>
    %c0_4 = arith.constant 0 : index
    %c0_5 = arith.constant 0 : index
    %5 = vector.load %arg10[%c0_4, %c0_5] : memref<8x32xf32, #tpu.memory_space<vmem>>, vector<8x32xf32>
    %cst = arith.constant dense<0.000000e+00> : vector<8x256xf32>
    %6 = tpu.matmul %5, %3, %cst {dimension_numbers = #tpu.dot_dimension_numbers<[1], [0], [0], [1], [0, 0, 1, 1], [], []>} : vector<8x32xf32>, vector<32x256xf32>, vector<8x256xf32> -> vector<8x256xf32>
    %7 = vector.broadcast %4 : vector<1x256xf32> to vector<8x256xf32>
    %8 = arith.addf %6, %7 : vector<8x256xf32>
    %c0_6 = arith.constant 0 : index
    %c0_7 = arith.constant 0 : index
    %9 = vector.load %arg9[%c0_6, %c0_7] : memref<8x256xf32, #tpu.memory_space<vmem>>, vector<8x256xf32>
    tpu.vector_store %arg9[%c0_6, %c0_7], %8 {strides = array<i32>} : memref<8x256xf32, #tpu.memory_space<vmem>>, vector<8x256xf32>,
    return
  }
  func.func @transform_0(%arg0: i32, %arg1: i32) -> (i32, i32) {
    %c0_i32 = arith.constant 0 : i32
    %c0_i32_0 = arith.constant 0 : i32
    return %arg0, %c0_i32 : i32, i32
  }
  func.func @transform_1(%arg0: i32, %arg1: i32) -> (i32, i32) {
    %c0_i32 = arith.constant 0 : i32
    %c0_i32_0 = arith.constant 0 : i32
    %c0_i32_1 = arith.constant 0 : i32
    return %c0_i32, %c0_i32_0 : i32, i32
  }
  func.func @transform_2(%arg0: i32, %arg1: i32) -> (i32, i32) {
    %c0_i32 = arith.constant 0 : i32
    %c0_i32_0 = arith.constant 0 : i32
    %c0_i32_1 = arith.constant 0 : i32
    return %c0_i32, %c0_i32_0 : i32, i32
  }
  func.func @transform_3(%arg0: i32, %arg1: i32) -> (i32, i32) {
    %c0_i32 = arith.constant 0 : i32
    %c0_i32_0 = arith.constant 0 : i32
    %c0_i32_1 = arith.constant 0 : i32
    return %c0_i32, %c0_i32_0 : i32, i32
  }
  func.func @transform_4(%arg0: i32, %arg1: i32) -> (i32, i32) {
    %c0_i32 = arith.constant 0 : i32
    %c0_i32_0 = arith.constant 0 : i32
    %c0_i32_1 = arith.constant 0 : i32
    return %c0_i32, %c0_i32_0 : i32, i32
  }
  func.func @transform_5(%arg0: i32, %arg1: i32) -> (i32, i32) {
    %c0_i32 = arith.constant 0 : i32
    %c0_i32_0 = arith.constant 0 : i32
    return %c0_i32, %arg1 : i32, i32
  }
  func.func @transform_6(%arg0: i32, %arg1: i32) -> (i32, i32) {
    %c0_i32 = arith.constant 0 : i32
    %c0_i32_0 = arith.constant 0 : i32
    return %c0_i32, %arg1 : i32, i32
  }
  func.func @transform_7(%arg0: i32, %arg1: i32) -> (i32, i32) {
    %c0_i32 = arith.constant 0 : i32
    return %arg0, %arg1 : i32, i32
  }
}

</mosaic_0001>

<llo_original>
// kernel: tpu_custom_call.1
$region0: #{tpu_custom_call.1}
  #allocation0 [shape = 'u32[]', space=smem, size = 0x4, offset = 0x4, fixed_abs, tag = 'smem constant byte address 0x4 - core index']
  #allocation1 [shape = 'u32[144,128]{1,0:T(1,128)}', space=vmem, size = 0x12000, scoped, tag = 'internal scratch']
  #allocation2 [shape = 'f32[8,32]{1,0:T(8,128)}', space=vmem, size = 0x1000, scoped, tag = 'scratch operand']
  %s0 = inlined_call_operand.hbm [shape: f32[16,32], index: 0, kind: input, shape index: {}]
  %s1 = inlined_call_operand.hbm [shape: f32[32,32], index: 1, kind: input, shape index: {}]
  %s2 = inlined_call_operand.vmem [shape: f32[1,32], index: 2, kind: input, shape index: {}]
  %s3 = inlined_call_operand.vmem [shape: f32[1,32], index: 3, kind: input, shape index: {}]
  %s4 = inlined_call_operand.vmem [shape: f32[1,32], index: 4, kind: input, shape index: {}]
  %s5 = inlined_call_operand.hbm [shape: f32[32,256], index: 5, kind: input, shape index: {}]
  %s6 = inlined_call_operand.vmem [shape: f32[1,256], index: 6, kind: input, shape index: {}]
  %s7 = inlined_call_operand.hbm [shape: f32[16,256], index: 7, kind: output, shape index: {}]
  %s8 = sld [smem:[#allocation0]]
  $region77: #{tpu_custom_call.1} parent=0
    _
  %s10 = ssub.s32 1, %s8
  %s11 = scalar_select 0, %s10, %s8
  $region1: #{tpu_custom_call.1} parent=0
    #allocation3 [shape = 'u8[8192]{0}', space=vmem, size = 0x2000, scoped, tag = 'input window, operand 0']
    #allocation4 [shape = 's32[2]{0}', space=sflag, size = 0x8, scoped, tag = 'scoped memory for tpu_custom_call.1']
    #allocation5 [shape = 's32[2]{0}', space=sflag, size = 0x8, scoped, tag = 'scoped memory for tpu_custom_call.1']
    #allocation6 [shape = 'u8[16384]{0}', space=vmem, size = 0x4000, scoped, tag = 'input window, operand 1, single buffered']
    #allocation7 [shape = 's32[1]{0}', space=sflag, size = 0x4, scoped, tag = 'scoped memory for tpu_custom_call.1']
    #allocation8 [shape = 'u8[32768]{0}', space=vmem, size = 0x8000, scoped, tag = 'input window, operand 5, single buffered']
    #allocation9 [shape = 'u8[16384]{0}', space=vmem, size = 0x4000, scoped, tag = 'output window, operand 0']
    %12 = vsyncpa [#allocation4], 0
    %s13 = scalar_lea.sflag [#allocation4], 1
    %14 = vsyncpa %s13, 0
    %15 = vsyncpa [#allocation7], 0
    %16 = vsyncpa [#allocation5], 0
    %s17 = scalar_lea.sflag [#allocation5], 1
    %18 = vsyncpa %s17, 0
    loop: start=0, step=1, limit=4
    $region2: #{tpu_custom_call.1} parent=1 // loop_pre_header
      _
    $region3: #{tpu_custom_call.1} parent=1 // loop_header
      %s20 = sphi 0, %s24
      %p21 = scmp.ge.s32.totalorder %s20, 4
      %s27 = sphi 0, %s39
      %s28 = sphi 0, %s35
      %s29 = sphi 0, %s27
      %s30 = sphi 0, %s28
      %s31 = sphi 0, %s29
      %s32 = sphi 0, %s30
      %s42 = sphi 0, %s44
      %s45 = sphi 0, %s42
      %s46 = sphi 0, %s45
      %s62 = sphi 0, %s46
      %s66 = sphi 0, %s66
      %s68 = sphi 0, %s66
      %s69 = sphi 0, %s68
      %s83 = sphi 0, %s69
      %s87 = sphi 0, %s87
      %s89 = sphi 0, %s87
      %s90 = sphi 0, %s89
      %s104 = sphi 0, %s90
      %s108 = sphi 0, %s108
      %s110 = sphi 0, %s108
      %s111 = sphi 0, %s110
      %s125 = sphi 0, %s111
      %s129 = sphi 0, %s129
      %s131 = sphi 0, %s129
      %s132 = sphi 0, %s131
      %s146 = sphi 0, %s132
      %s150 = sphi 0, %s150
      %s152 = sphi 0, %s150
      %s153 = sphi 0, %s152
      %s167 = sphi 0, %s153
      %s171 = sphi 0, %s171
      %s173 = sphi 0, %s171
      %s174 = sphi 0, %s173
      %s188 = sphi 0, %s174
      %s196 = sphi 0, %s198
      %s199 = sphi 0, %s196
      %s200 = sphi 0, %s199
      %s216 = sphi 0, %s200
    $region4: #{tpu_custom_call.1} parent=1 // loop_header_branch
      %23 = sbr.rel (%p21) target = $region8
    $region5: #{tpu_custom_call.1} parent=1 // loop_body
      %s25 = ssub.s32 %s20, 1
      %s26 = ssub.s32 %s20, 2
      %s33 = sadd.s32 1, %s28
      %p34 = scmp.ge.s32.totalorder %s33, 1
      %s35 = scalar_select %p34, 0, %s33
      %s36 = sadd.s32 1, %s27
      %s37 = scalar_select %p34, %s36, %s27
      %p38 = scmp.ge.s32.totalorder %s37, 2
      %s39 = scalar_select %p38, 0, %s37
      %s40 = ssub.s32 %s27, %s39
      %p41 = scmp.eq.s32.totalorder %s40, 0
      %s43 = sadd.s32 %s42, 1
      %s44 = scalar_select %p41, %s42, %s43
      %p47 = pneg %p41
      %p48 = scmp.eq.s32.totalorder %s20, 1
      %p49 = por %p47, %p48
      %p50 = scmp.ne.s32.totalorder %s42, %s45
      %p51 = scmp.eq.s32.totalorder %s20, 0
      %p52 = por %p50, %p51
      %p53 = scmp.ne.s32.totalorder %s42, %s45
      %p54 = scmp.eq.s32.totalorder %s25, 1
      %p55 = por %p53, %p54
      %p56 = scmp.ne.s32.totalorder %s45, %s46
      %p57 = scmp.eq.s32.totalorder %s25, 0
      %p58 = por %p56, %p57
      %p59 = scmp.ne.s32.totalorder %s45, %s46
      %p60 = scmp.eq.s32.totalorder %s26, 1
      %p61 = por %p59, %p60
      %p63 = scmp.ne.s32.totalorder %s46, %s62
      %p64 = scmp.eq.s32.totalorder %s26, 0
      %p65 = por %p63, %p64
      %s67 = sadd.s32 %s66, 1
      %p70 = scmp.eq.s32.totalorder %s20, 1
      %p71 = scmp.ne.s32.totalorder %s66, %s68
      %p72 = scmp.eq.s32.totalorder %s20, 0
      %p73 = por %p71, %p72
      %p74 = scmp.ne.s32.totalorder %s66, %s68
      %p75 = scmp.eq.s32.totalorder %s25, 1
      %p76 = por %p74, %p75
      %p77 = scmp.ne.s32.totalorder %s68, %s69
      %p78 = scmp.eq.s32.totalorder %s25, 0
      %p79 = por %p77, %p78
      %p80 = scmp.ne.s32.totalorder %s68, %s69
      %p81 = scmp.eq.s32.totalorder %s26, 1
      %p82 = por %p80, %p81
      %p84 = scmp.ne.s32.totalorder %s69, %s83
      %p85 = scmp.eq.s32.totalorder %s26, 0
      %p86 = por %p84, %p85
      %s88 = sadd.s32 %s87, 1
      %p91 = scmp.eq.s32.totalorder %s20, 1
      %p92 = scmp.ne.s32.totalorder %s87, %s89
      %p93 = scmp.eq.s32.totalorder %s20, 0
      %p94 = por %p92, %p93
      %p95 = scmp.ne.s32.totalorder %s87, %s89
      %p96 = scmp.eq.s32.totalorder %s25, 1
      %p97 = por %p95, %p96
      %p98 = scmp.ne.s32.totalorder %s89, %s90
      %p99 = scmp.eq.s32.totalorder %s25, 0
      %p100 = por %p98, %p99
      %p101 = scmp.ne.s32.totalorder %s89, %s90
      %p102 = scmp.eq.s32.totalorder %s26, 1
      %p103 = por %p101, %p102
      %p105 = scmp.ne.s32.totalorder %s90, %s104
      %p106 = scmp.eq.s32.totalorder %s26, 0
      %p107 = por %p105, %p106
      %s109 = sadd.s32 %s108, 1
      %p112 = scmp.eq.s32.totalorder %s20, 1
      %p113 = scmp.ne.s32.totalorder %s108, %s110
      %p114 = scmp.eq.s32.totalorder %s20, 0
      %p115 = por %p113, %p114
      %p116 = scmp.ne.s32.totalorder %s108, %s110
      %p117 = scmp.eq.s32.totalorder %s25, 1
      %p118 = por %p116, %p117
      %p119 = scmp.ne.s32.totalorder %s110, %s111
      %p120 = scmp.eq.s32.totalorder %s25, 0
      %p121 = por %p119, %p120
      %p122 = scmp.ne.s32.totalorder %s110, %s111
      %p123 = scmp.eq.s32.totalorder %s26, 1
      %p124 = por %p122, %p123
      %p126 = scmp.ne.s32.totalorder %s111, %s125
      %p127 = scmp.eq.s32.totalorder %s26, 0
      %p128 = por %p126, %p127
      %s130 = sadd.s32 %s129, 1
      %p133 = scmp.eq.s32.totalorder %s20, 1
      %p134 = scmp.ne.s32.totalorder %s129, %s131
      %p135 = scmp.eq.s32.totalorder %s20, 0
      %p136 = por %p134, %p135
      %p137 = scmp.ne.s32.totalorder %s129, %s131
      %p138 = scmp.eq.s32.totalorder %s25, 1
      %p139 = por %p137, %p138
      %p140 = scmp.ne.s32.totalorder %s131, %s132
      %p141 = scmp.eq.s32.totalorder %s25, 0
      %p142 = por %p140, %p141
      %p143 = scmp.ne.s32.totalorder %s131, %s132
      %p144 = scmp.eq.s32.totalorder %s26, 1
      %p145 = por %p143, %p144
      %p147 = scmp.ne.s32.totalorder %s132, %s146
      %p148 = scmp.eq.s32.totalorder %s26, 0
      %p149 = por %p147, %p148
      %s151 = sadd.s32 %s150, 1
      %p154 = scmp.eq.s32.totalorder %s20, 1
      %p155 = scmp.ne.s32.totalorder %s150, %s152
      %p156 = scmp.eq.s32.totalorder %s20, 0
      %p157 = por %p155, %p156
      %p158 = scmp.ne.s32.totalorder %s150, %s152
      %p159 = scmp.eq.s32.totalorder %s25, 1
      %p160 = por %p158, %p159
      %p161 = scmp.ne.s32.totalorder %s152, %s153
      %p162 = scmp.eq.s32.totalorder %s25, 0
      %p163 = por %p161, %p162
      %p164 = scmp.ne.s32.totalorder %s152, %s153
      %p165 = scmp.eq.s32.totalorder %s26, 1
      %p166 = por %p164, %p165
      %p168 = scmp.ne.s32.totalorder %s153, %s167
      %p169 = scmp.eq.s32.totalorder %s26, 0
      %p170 = por %p168, %p169
      %s172 = sadd.s32 %s171, 1
      %p175 = scmp.eq.s32.totalorder %s20, 1
      %p176 = scmp.ne.s32.totalorder %s171, %s173
      %p177 = scmp.eq.s32.totalorder %s20, 0
      %p178 = por %p176, %p177
      %p179 = scmp.ne.s32.totalorder %s171, %s173
      %p180 = scmp.eq.s32.totalorder %s25, 1
      %p181 = por %p179, %p180
      %p182 = scmp.ne.s32.totalorder %s173, %s174
      %p183 = scmp.eq.s32.totalorder %s25, 0
      %p184 = por %p182, %p183
      %p185 = scmp.ne.s32.totalorder %s173, %s174
      %p186 = scmp.eq.s32.totalorder %s26, 1
      %p187 = por %p185, %p186
      %p189 = scmp.ne.s32.totalorder %s174, %s188
      %p190 = scmp.eq.s32.totalorder %s26, 0
      %p191 = por %p189, %p190
      %s192 = ssub.s32 %s27, %s39
      %s193 = ssub.s32 %s28, %s35
      %s194 = sor.u32 %s192, %s193
      %p195 = scmp.eq.s32.totalorder %s194, 0
      %s197 = sadd.s32 %s196, 1
      %s198 = scalar_select %p195, %s196, %s197
      %p201 = pneg %p195
      %p202 = scmp.eq.s32.totalorder %s20, 1
      %p203 = por %p201, %p202
      %p204 = scmp.ne.s32.totalorder %s196, %s199
      %p205 = scmp.eq.s32.totalorder %s20, 0
      %p206 = por %p204, %p205
      %p207 = scmp.ne.s32.totalorder %s196, %s199
      %p208 = scmp.eq.s32.totalorder %s25, 1
      %p209 = por %p207, %p208
      %p210 = scmp.ne.s32.totalorder %s199, %s200
      %p211 = scmp.eq.s32.totalorder %s25, 0
      %p212 = por %p210, %p211
      %p213 = scmp.ne.s32.totalorder %s199, %s200
      %p214 = scmp.eq.s32.totalorder %s26, 1
      %p215 = por %p213, %p214
      %p217 = scmp.ne.s32.totalorder %s200, %s216
      %p218 = scmp.eq.s32.totalorder %s26, 0
      %p219 = por %p217, %p218
      %p220 = scmp.le.s32.totalorder 1, %s20
      %p221 = scmp.lt.s32.totalorder %s20, 3
      %p222 = pnand %p220, %p221
      %p223 = pneg %p222
      // Predicated region
      $region9: #{tpu_custom_call.1} parent=5 // pred_check
        _
      $region10: #{tpu_custom_call.1} parent=5 // pred_check_branch
        %225 = sbr.rel (%p222) target = $region12
      $region11: #{tpu_custom_call.1} parent=5 // pred_region
        %s226 = ssub.s32 %s20, 1
        // Predicated region
        $region13: #{tpu_custom_call.1} parent=11 // pred_check
          %p227 = pneg %p79
        $region14: #{tpu_custom_call.1} parent=11 // pred_check_branch
          %229 = sbr.rel (%p227) target = $region16
        $region15: #{tpu_custom_call.1} parent=11 // pred_region
          %s231 = ssub.s32 512, 512
          %232 = vsyncadd [#allocation7], %s231
          %s233 = sshll.u32 [#allocation6], 4
          %s234 = int_to_ptr.vmem [resolvable:$true] %s233
          %239 = dma.hbm_to_vmem [thread:$0]  %s1, 512, %s234, [#allocation7], 128, 128, 8
        $region16: #{tpu_custom_call.1} parent=11 // pred_fallthru
          _
        // Predicated region
        $region17: #{tpu_custom_call.1} parent=11 // pred_check
          %p240 = pneg %p100
        $region18: #{tpu_custom_call.1} parent=11 // pred_check_branch
          %242 = sbr.rel (%p240) target = $region20
        $region19: #{tpu_custom_call.1} parent=11 // pred_region
          _
        $region20: #{tpu_custom_call.1} parent=11 // pred_fallthru
          _
        // Predicated region
        $region21: #{tpu_custom_call.1} parent=11 // pred_check
          %p243 = pneg %p121
        $region22: #{tpu_custom_call.1} parent=11 // pred_check_branch
          %245 = sbr.rel (%p243) target = $region24
        $region23: #{tpu_custom_call.1} parent=11 // pred_region
          _
        $region24: #{tpu_custom_call.1} parent=11 // pred_fallthru
          _
        // Predicated region
        $region25: #{tpu_custom_call.1} parent=11 // pred_check
          %p246 = pneg %p142
        $region26: #{tpu_custom_call.1} parent=11 // pred_check_branch
          %248 = sbr.rel (%p246) target = $region28
        $region27: #{tpu_custom_call.1} parent=11 // pred_region
          _
        $region28: #{tpu_custom_call.1} parent=11 // pred_fallthru
          _
        // Predicated region
        $region29: #{tpu_custom_call.1} parent=11 // pred_check
          %p249 = pneg %p163
        $region30: #{tpu_custom_call.1} parent=11 // pred_check_branch
          %251 = sbr.rel (%p249) target = $region32
        $region31: #{tpu_custom_call.1} parent=11 // pred_region
          %s253 = ssub.s32 1024, 1024
          %254 = vsyncadd [#allocation7], %s253
          %s255 = sshll.u32 [#allocation8], 4
          %s256 = int_to_ptr.vmem [resolvable:$true] %s255
          %261 = dma.hbm_to_vmem [thread:$0]  %s5, 1024, %s256, [#allocation7], 256, 256, 16
        $region32: #{tpu_custom_call.1} parent=11 // pred_fallthru
          _
        // Predicated region
        $region33: #{tpu_custom_call.1} parent=11 // pred_check
          %p262 = pneg %p184
        $region34: #{tpu_custom_call.1} parent=11 // pred_check_branch
          %264 = sbr.rel (%p262) target = $region36
        $region35: #{tpu_custom_call.1} parent=11 // pred_region
          _
        $region36: #{tpu_custom_call.1} parent=11 // pred_fallthru
          _
      $region12: #{tpu_custom_call.1} parent=5 // pred_fallthru
        _
      %p265 = scmp.lt.s32.totalorder %s20, 2
      // Predicated region
      $region37: #{tpu_custom_call.1} parent=5 // pred_check
        %p266 = pneg %p265
      $region38: #{tpu_custom_call.1} parent=5 // pred_check_branch
        %268 = sbr.rel (%p266) target = $region40
      $region39: #{tpu_custom_call.1} parent=5 // pred_region
        // Predicated region
        $region41: #{tpu_custom_call.1} parent=39 // pred_check
          %p269 = pneg %p52
        $region42: #{tpu_custom_call.1} parent=39 // pred_check_branch
          %271 = sbr.rel (%p269) target = $region44
        $region43: #{tpu_custom_call.1} parent=39 // pred_region
          %s272 = sand.u32 %s42, 1
          %s273 = scalar_lea.sflag [#allocation4], %s272
          %s274 = sand.u32 %s42, 1
          %s275 = smul.addr %s274, 8
          %s276 = scalar_lea.vmem [#allocation3], %s275
          %s278 = ssub.s32 128, 128
          %279 = vsyncadd %s273, %s278
          %s280 = smul.addr %s27, 128
          %s281 = scalar_lea.hbm %s0, %s280
          %s283 = sshll.u32 %s276, 4
          %s284 = int_to_ptr.vmem [resolvable:$true] %s283
          %286 = dma.hbm_to_vmem [thread:$0]  %s281, 128, %s284, %s273
        $region44: #{tpu_custom_call.1} parent=39 // pred_fallthru
          _
      $region40: #{tpu_custom_call.1} parent=5 // pred_fallthru
        _
      %p287 = scmp.le.s32.totalorder 1, %s20
      %p288 = scmp.lt.s32.totalorder %s20, 3
      %p289 = pnand %p287, %p288
      %p290 = pneg %p289
      // Predicated region
      $region45: #{tpu_custom_call.1} parent=5 // pred_check
        _
      $region46: #{tpu_custom_call.1} parent=5 // pred_check_branch
        %292 = sbr.rel (%p289) target = $region48
      $region47: #{tpu_custom_call.1} parent=5 // pred_region
        %s293 = ssub.s32 %s20, 1
        %s294 = sand.u32 %s45, 1
        %s295 = scalar_lea.sflag [#allocation4], %s294
        %s296 = sand.u32 %s45, 1
        %s297 = smul.addr %s296, 8
        %s298 = scalar_lea.vmem [#allocation3], %s297
        // Predicated region
        $region49: #{tpu_custom_call.1} parent=47 // pred_check
          %p299 = pneg %p58
        $region50: #{tpu_custom_call.1} parent=47 // pred_check_branch
          %301 = sbr.rel (%p299) target = $region52
        $region51: #{tpu_custom_call.1} parent=47 // pred_region
          %302 = dma.done %s295, 128
        $region52: #{tpu_custom_call.1} parent=47 // pred_fallthru
          _
        // Predicated region
        $region53: #{tpu_custom_call.1} parent=47 // pred_check
          %p303 = pneg %p79
        $region54: #{tpu_custom_call.1} parent=47 // pred_check_branch
          %305 = sbr.rel (%p303) target = $region56
        $region55: #{tpu_custom_call.1} parent=47 // pred_region
          %306 = dma.done [#allocation7], 512
        $region56: #{tpu_custom_call.1} parent=47 // pred_fallthru
          _
        // Predicated region
        $region57: #{tpu_custom_call.1} parent=47 // pred_check
          %p307 = pneg %p163
        $region58: #{tpu_custom_call.1} parent=47 // pred_check_branch
          %309 = sbr.rel (%p307) target = $region60
        $region59: #{tpu_custom_call.1} parent=47 // pred_region
          %310 = dma.done [#allocation7], 1024
        $region60: #{tpu_custom_call.1} parent=47 // pred_fallthru
          _
        %s311 = sand.u32 %s45, 1
        %s312 = scalar_lea.sflag [#allocation4], %s311
        %s313 = sand.u32 %s45, 1
        %s314 = smul.addr %s313, 8
        %s315 = scalar_lea.vmem [#allocation3], %s314
        %p316 = pneg %p58
        %p317 = pneg %p55
        %p318 = pneg %p79
        %p319 = pneg %p76
        %p320 = pneg %p100
        %p321 = pneg %p97
        %p322 = pneg %p121
        %p323 = pneg %p118
        %p324 = pneg %p142
        %p325 = pneg %p139
        %p326 = pneg %p163
        %p327 = pneg %p160
        %p328 = pneg %p184
        %p329 = pneg %p181
        %p330 = pneg %p212
        %p331 = pneg %p209
        %s332 = sand.u32 %s199, 1
        %s333 = scalar_lea.sflag [#allocation5], %s332
        %s334 = sand.u32 %s199, 1
        %s335 = smul.addr %s334, 16
        %s336 = scalar_lea.vmem [#allocation9], %s335
        %s337 = smul.u32 2, %s30
        %p338 = scmp.eq.s32.totalorder %s30, 0
        // Predicated region
        $region61: #{tpu_custom_call.1} parent=47 // pred_check
          %p339 = pneg %p338
        $region62: #{tpu_custom_call.1} parent=47 // pred_check_branch
          %341 = sbr.rel (%p339) target = $region64
        $region63: #{tpu_custom_call.1} parent=47 // pred_region
          %v342 = vld [vmem:[%s298] sm:$0xff]
          %v343 = vld [vmem:[#allocation6] sm:$0xff]
          %v344 = vld [vmem:[#allocation6 + $0x8] sm:$0xff]
          %v345 = vld [vmem:[#allocation6 + $0x10] sm:$0xff]
          %v346 = vld [vmem:[#allocation6 + $0x18] sm:$0xff]
          %v347 = vld [vmem:[%s2] sm:$0x1]
          %v349 = vlaneseq
          %v350 = vshrl.u32 %v349, 7
          %v351 = vsub.s32 0, %v350
          %v352 = vrot.slane %v347, %v351
          %vm354 = vcmask 261120
          %v356 = vsel %vm354, %v342, 0
          %358 = vmatprep.subr.mxu0 0.0
          %359 = vmatpush1.msra.mxu0 %v343
          %360 = vmatprep.subr.mxu0 0.0
          %361 = vmatpush1.msra.mxu0 %v344
          %362 = vmatprep.subr.mxu0 0.0
          %363 = vmatpush1.msra.mxu0 %v345
          %364 = vmatprep.subr.mxu0 0.0
          %365 = vmatpush1.msra.mxu0 %v346
          %366 = vmatprep.subr.mxu0 0.0
          %367 = vmatpush1.msra.mxu0 0.0
          %368 = vmatprep.subr.mxu0 0.0
          %369 = vmatpush1.msra.mxu0 0.0
          %370 = vmatprep.subr.mxu0 0.0
          %371 = vmatpush1.msra.mxu0 0.0
          %372 = vmatprep.subr.mxu0 0.0
          %373 = vmatpush1.msra.mxu0 0.0
          %374 = vmatprep.subr.mxu0 0.0
          %375 = vmatpush1.msra.mxu0 0.0
          %376 = vmatprep.subr.mxu0 0.0
          %377 = vmatpush1.msra.mxu0 0.0
          %378 = vmatprep.subr.mxu0 0.0
          %379 = vmatpush1.msra.mxu0 0.0
          %380 = vmatprep.subr.mxu0 0.0
          %381 = vmatpush1.msra.mxu0 0.0
          %382 = vmatprep.subr.mxu0 0.0
          %383 = vmatpush1.msra.mxu0 0.0
          %384 = vmatprep.subr.mxu0 0.0
          %385 = vmatpush1.msra.mxu0 0.0
          %386 = vmatprep.subr.mxu0 0.0
          %387 = vmatpush1.msra.mxu0 0.0
          %388 = vmatprep.subr.mxu0 0.0
          %389 = vmatpush1.msra.mxu0 0.0
          %390 = vmatprep.subr.mxu0 0.0
          %391 = vmatpush1.msra.mxu0 0.0
          %392 = vmatprep.subr.mxu0 0.0
          %393 = vmatpush1.msra.mxu0 0.0
          %394 = vmatprep.subr.mxu0 0.0
          %395 = vmatpush1.msra.mxu0 0.0
          %396 = vmatprep.subr.mxu0 0.0
          %397 = vmatpush1.msra.mxu0 0.0
          %398 = vmatprep.subr.mxu0 0.0
          %399 = vmatpush1.msra.mxu0 0.0
          %400 = vmatprep.subr.mxu0 0.0
          %401 = vmatpush1.msra.mxu0 0.0
          %402 = vmatprep.subr.mxu0 0.0
          %403 = vmatpush1.msra.mxu0 0.0
          %404 = vmatprep.subr.mxu0 0.0
          %405 = vmatpush1.msra.mxu0 0.0
          %406 = vmatprep.subr.mxu0 0.0
          %407 = vmatpush1.msra.mxu0 0.0
          %408 = vmatprep.subr.mxu0 0.0
          %409 = vmatpush1.msra.mxu0 0.0
          %410 = vmatprep.subr.mxu0 0.0
          %411 = vmatpush1.msra.mxu0 0.0
          %412 = vmatprep.subr.mxu0 0.0
          %413 = vmatpush1.msra.mxu0 0.0
          %414 = vmatprep.subr.mxu0 0.0
          %415 = vmatpush1.msra.mxu0 0.0
          %416 = vmatprep.subr.mxu0 0.0
          %417 = vmatpush1.msra.mxu0 0.0
          %418 = vmatprep.subr.mxu0 0.0
          %419 = vmatpush1.msra.mxu0 0.0
          %420 = vmatprep.subr.mxu0 0.0
          %421 = vmatpush1.msra.mxu0 0.0
          %422 = vmatprep.mubr.f32.mxu0 0.0
          %423 = vmatmul.mubr.f32.gmra.mrb[0].mxu0 %v356
          %v424 = vpop.f32.mrb[0].mxu0
          %v425 = vadd.f32 %v352, %v424
          %v426 = vpop.f32.mrb[0].mxu0
          %427 = vdwg.mxu0
          %v428 = vmul.f32 %v425, 0.5
          %v429 = vmul.f32 %v425, 0.70710677
          %v430 = verf.f32.pop %v429
          %v431 = vadd.f32 %v430, 1.0
          %v432 = vmul.f32 %v428, %v431
          %v433 = vsel %vm354, %v432, 0.0
          %434 = vadd.xlane.f32.xlu0 %v433
          %v435 = vpop.xlane.xlu0 %434
          %v436 = vrcp.pop 32.0
          %v437 = vmul.f32 %v435, %v436
          %v438 = vsub.f32 %v432, %v437
          %v439 = vmul.f32 %v438, %v438
          %v440 = vsel %vm354, %v439, 0.0
          %441 = vadd.xlane.f32.xlu0 %v440
          %v442 = vpop.xlane.xlu0 %441
          %v443 = vmul.f32 %v442, %v436
          %v444 = vadd.f32 %v443, 1e-12
          %v445 = vrsqrt.pop %v444
          %v446 = vmul.f32 %v438, %v445
          %v447 = vld [vmem:[%s3] sm:$0x1]
          %v449 = vlaneseq
          %v450 = vshrl.u32 %v449, 7
          %v451 = vsub.s32 0, %v450
          %v452 = vrot.slane %v447, %v451
          %v454 = vmul.f32 %v446, %v452
          %v455 = vld [vmem:[%s4] sm:$0x1]
          %v457 = vlaneseq
          %v458 = vshrl.u32 %v457, 7
          %v459 = vsub.s32 0, %v458
          %v460 = vrot.slane %v455, %v459
          %v462 = vadd.f32 %v454, %v460
          %463 = vst.msk [vmem:[#allocation2] sm:$0xff] %vm354, %v462
        $region64: #{tpu_custom_call.1} parent=47 // pred_fallthru
          _
        %s464 = smul.u32 %s30, 256
        %s465 = sshra.s32 %s464, 7
        %s466 = sand.u32 %s464, 127
        %s467 = smul.addr %s465, 8
        %s468 = scalar_lea.vmem [#allocation8], %s467
        %v469 = vld [vmem:[%s468] sm:$0xff]
        %v470 = vld [vmem:[%s468 + $0x8] sm:$0xff]
        %v471 = vld [vmem:[%s468 + $0x10] sm:$0xff]
        %v472 = vld [vmem:[%s468 + $0x18] sm:$0xff]
        %v473 = vld [vmem:[%s468 + $0x20] sm:$0xff]
        %v474 = vld [vmem:[%s468 + $0x28] sm:$0xff]
        %v475 = vld [vmem:[%s468 + $0x30] sm:$0xff]
        %v476 = vld [vmem:[%s468 + $0x38] sm:$0xff]
        %s477 = scalar_lea.vmem %s6, %s465
        %v478 = vld [vmem:[%s477] sm:$0x3]
        %v479 = vld [vmem:[#allocation2] sm:$0xff]
        %v481 = vlaneseq
        %v482 = vshrl.u32 %v481, 7
        %v483 = vsub.s32 0, %v482
        %v484 = vrot.slane %v478, %v483
        %v485 = vlaneseq
        %v486 = vshrl.u32 %v485, 7
        %v487 = vsub.s32 1, %v486
        %v488 = vrot.slane %v478, %v487
        %vm491 = vcmask 261120
        %v493 = vsel %vm491, %v479, 0
        %495 = vmatprep.subr.mxu0 %v470
        %496 = vmatpush1.msra.mxu0 %v469
        %497 = vmatprep.subr.mxu0 %v472
        %498 = vmatpush1.msra.mxu0 %v471
        %499 = vmatprep.subr.mxu0 %v474
        %500 = vmatpush1.msra.mxu0 %v473
        %501 = vmatprep.subr.mxu0 %v476
        %502 = vmatpush1.msra.mxu0 %v475
        %503 = vmatprep.subr.mxu0 0.0
        %504 = vmatpush1.msra.mxu0 0.0
        %505 = vmatprep.subr.mxu0 0.0
        %506 = vmatpush1.msra.mxu0 0.0
        %507 = vmatprep.subr.mxu0 0.0
        %508 = vmatpush1.msra.mxu0 0.0
        %509 = vmatprep.subr.mxu0 0.0
        %510 = vmatpush1.msra.mxu0 0.0
        %511 = vmatprep.subr.mxu0 0.0
        %512 = vmatpush1.msra.mxu0 0.0
        %513 = vmatprep.subr.mxu0 0.0
        %514 = vmatpush1.msra.mxu0 0.0
        %515 = vmatprep.subr.mxu0 0.0
        %516 = vmatpush1.msra.mxu0 0.0
        %517 = vmatprep.subr.mxu0 0.0
        %518 = vmatpush1.msra.mxu0 0.0
        %519 = vmatprep.subr.mxu0 0.0
        %520 = vmatpush1.msra.mxu0 0.0
        %521 = vmatprep.subr.mxu0 0.0
        %522 = vmatpush1.msra.mxu0 0.0
        %523 = vmatprep.subr.mxu0 0.0
        %524 = vmatpush1.msra.mxu0 0.0
        %525 = vmatprep.subr.mxu0 0.0
        %526 = vmatpush1.msra.mxu0 0.0
        %527 = vmatprep.subr.mxu0 0.0
        %528 = vmatpush1.msra.mxu0 0.0
        %529 = vmatprep.subr.mxu0 0.0
        %530 = vmatpush1.msra.mxu0 0.0
        %531 = vmatprep.subr.mxu0 0.0
        %532 = vmatpush1.msra.mxu0 0.0
        %533 = vmatprep.subr.mxu0 0.0
        %534 = vmatpush1.msra.mxu0 0.0
        %535 = vmatprep.subr.mxu0 0.0
        %536 = vmatpush1.msra.mxu0 0.0
        %537 = vmatprep.subr.mxu0 0.0
        %538 = vmatpush1.msra.mxu0 0.0
        %539 = vmatprep.subr.mxu0 0.0
        %540 = vmatpush1.msra.mxu0 0.0
        %541 = vmatprep.subr.mxu0 0.0
        %542 = vmatpush1.msra.mxu0 0.0
        %543 = vmatprep.subr.mxu0 0.0
        %544 = vmatpush1.msra.mxu0 0.0
        %545 = vmatprep.subr.mxu0 0.0
        %546 = vmatpush1.msra.mxu0 0.0
        %547 = vmatprep.subr.mxu0 0.0
        %548 = vmatpush1.msra.mxu0 0.0
        %549 = vmatprep.subr.mxu0 0.0
        %550 = vmatpush1.msra.mxu0 0.0
        %551 = vmatprep.subr.mxu0 0.0
        %552 = vmatpush1.msra.mxu0 0.0
        %553 = vmatprep.subr.mxu0 0.0
        %554 = vmatpush1.msra.mxu0 0.0
        %555 = vmatprep.subr.mxu0 0.0
        %556 = vmatpush1.msra.mxu0 0.0
        %557 = vmatprep.subr.mxu0 0.0
        %558 = vmatpush1.msra.mxu0 0.0
        %559 = vmatprep.mubr.f32.mxu0 0.0
        %560 = vmatmul.mubr.f32.gmra.mrb[0].mxu0 %v493
        %v561 = vpop.f32.mrb[0].mxu0
        %v562 = vadd.f32 %v484, %v561
        %v563 = vpop.f32.mrb[0].mxu0
        %v564 = vadd.f32 %v488, %v563
        %565 = vdwg.mxu0
        %566 = vst [vmem:[%s336] sm:$0xff] %v562
        %567 = vst [vmem:[%s336 + $0x8] sm:$0xff] %v564
        %s568 = sand.u32 %s199, 1
        %s569 = scalar_lea.sflag [#allocation5], %s568
        %s570 = sand.u32 %s199, 1
        %s571 = smul.addr %s570, 16
        %s572 = scalar_lea.vmem [#allocation9], %s571
        // Predicated region
        $region65: #{tpu_custom_call.1} parent=47 // pred_check
          %p573 = pneg %p209
        $region66: #{tpu_custom_call.1} parent=47 // pred_check_branch
          %575 = sbr.rel (%p573) target = $region68
        $region67: #{tpu_custom_call.1} parent=47 // pred_region
          %s576 = smul.u32 2, %s30
          %s578 = ssub.s32 256, 256
          %579 = vsyncadd %s569, %s578
          %s580 = smul.addr %s29, 2
          %s581 = sadd.s32 %s576, %s580
          %s582 = smul.addr %s581, 128
          %s583 = scalar_lea.hbm %s7, %s582
          %s585 = sshll.u32 %s572, 4
          %s586 = int_to_ptr.vmem [resolvable:$true] %s585
          %588 = dma.vmem_to_hbm [thread:$0]  %s586, 256, %s583, %s569
        $region68: #{tpu_custom_call.1} parent=47 // pred_fallthru
          _
      $region48: #{tpu_custom_call.1} parent=5 // pred_fallthru
        _
      %p589 = scmp.le.s32.totalorder 2, %s20
      // Predicated region
      $region69: #{tpu_custom_call.1} parent=5 // pred_check
        %p590 = pneg %p589
      $region70: #{tpu_custom_call.1} parent=5 // pred_check_branch
        %592 = sbr.rel (%p590) target = $region72
      $region71: #{tpu_custom_call.1} parent=5 // pred_region
        %s593 = ssub.s32 %s20, 2
        // Predicated region
        $region73: #{tpu_custom_call.1} parent=71 // pred_check
          %p594 = pneg %p215
        $region74: #{tpu_custom_call.1} parent=71 // pred_check_branch
          %596 = sbr.rel (%p594) target = $region76
        $region75: #{tpu_custom_call.1} parent=71 // pred_region
          %s597 = sand.u32 %s200, 1
          %s598 = scalar_lea.sflag [#allocation5], %s597
          %s599 = sand.u32 %s200, 1
          %s600 = smul.addr %s599, 16
          %s601 = scalar_lea.vmem [#allocation9], %s600
          %602 = dma.done %s598, 256
        $region76: #{tpu_custom_call.1} parent=71 // pred_fallthru
          _
      $region72: #{tpu_custom_call.1} parent=5 // pred_fallthru
        _
    $region6: #{tpu_custom_call.1} parent=1 // loop_footer
      %s24 = sadd.s32 1, %s20
    $region7: #{tpu_custom_call.1} parent=1 // loop_footer_branch
      %19 = sbr.rel target = $region3
    $region8: #{tpu_custom_call.1} parent=1 // loop_exit
      _
    %603 = vsyncpa [#allocation4], 1
    %s604 = scalar_lea.sflag [#allocation4], 1
    %605 = vsyncpa %s604, 1
    %606 = vsyncpa [#allocation7], 1
    %607 = vsyncpa [#allocation5], 1
    %s608 = scalar_lea.sflag [#allocation5], 1
    %609 = vsyncpa %s608, 1

// kernel: tpu_custom_call.1
$region0: #{tpu_custom_call.1}
  #allocation0 [shape = 'u32[]', space=smem, size = 0x4, offset = 0x4, fixed_abs, tag = 'smem constant byte address 0x4 - core index']
  #allocation1 [shape = 'u32[144,128]{1,0:T(1,128)}', space=vmem, size = 0x12000, scoped, tag = 'internal scratch']
  #allocation2 [shape = 'f32[8,32]{1,0:T(8,128)}', space=vmem, size = 0x1000, scoped, tag = 'scratch operand']
  %s0 = inlined_call_operand.hbm [shape: f32[16,32], index: 0, kind: input, shape index: {}]
  %s1 = inlined_call_operand.hbm [shape: f32[32,32], index: 1, kind: input, shape index: {}]
  %s2 = inlined_call_operand.vmem [shape: f32[1,32], index: 2, kind: input, shape index: {}]
  %s3 = inlined_call_operand.vmem [shape: f32[1,32], index: 3, kind: input, shape index: {}]
  %s4 = inlined_call_operand.vmem [shape: f32[1,32], index: 4, kind: input, shape index: {}]
  %s5 = inlined_call_operand.hbm [shape: f32[32,256], index: 5, kind: input, shape index: {}]
  %s6 = inlined_call_operand.vmem [shape: f32[1,256], index: 6, kind: input, shape index: {}]
  %s7 = inlined_call_operand.hbm [shape: f32[16,256], index: 7, kind: output, shape index: {}]
  %s8 = sld [smem:[#allocation0]]
  $region77: #{tpu_custom_call.1} parent=0
    _
  %s10 = ssub.s32 1, %s8
  %s11 = scalar_select 0, %s10, %s8
  $region1: #{tpu_custom_call.1} parent=0
    #allocation3 [shape = 'u8[8192]{0}', space=vmem, size = 0x2000, scoped, tag = 'input window, operand 0']
    #allocation4 [shape = 's32[2]{0}', space=sflag, size = 0x8, scoped, tag = 'scoped memory for tpu_custom_call.1']
    #allocation5 [shape = 's32[2]{0}', space=sflag, size = 0x8, scoped, tag = 'scoped memory for tpu_custom_call.1']
    #allocation6 [shape = 'u8[16384]{0}', space=vmem, size = 0x4000, scoped, tag = 'input window, operand 1, single buffered']
    #allocation7 [shape = 's32[1]{0}', space=sflag, size = 0x4, scoped, tag = 'scoped memory for tpu_custom_call.1']
    #allocation8 [shape = 'u8[32768]{0}', space=vmem, size = 0x8000, scoped, tag = 'input window, operand 5, single buffered']
    #allocation9 [shape = 'u8[16384]{0}', space=vmem, size = 0x4000, scoped, tag = 'output window, operand 0']
    %12 = vsyncpa [#allocation4], 0
    %s13 = scalar_lea.sflag [#allocation4], 1
    %14 = vsyncpa %s13, 0
    %15 = vsyncpa [#allocation7], 0
    %16 = vsyncpa [#allocation5], 0
    %s17 = scalar_lea.sflag [#allocation5], 1
    %18 = vsyncpa %s17, 0
    loop: start=0, step=1, limit=4
    $region2: #{tpu_custom_call.1} parent=1 // loop_pre_header
      _
    $region3: #{tpu_custom_call.1} parent=1 // loop_header
      %s20 = sphi 0, %s24
      %p21 = scmp.ge.s32.totalorder %s20, 4
      %s27 = sphi 0, %s39
      %s28 = sphi 0, %s35
      %s29 = sphi 0, %s27
      %s30 = sphi 0, %s28
      %s31 = sphi 0, %s29
      %s32 = sphi 0, %s30
      %s42 = sphi 0, %s44
      %s45 = sphi 0, %s42
      %s46 = sphi 0, %s45
      %s62 = sphi 0, %s46
      %s66 = sphi 0, %s66
      %s68 = sphi 0, %s66
      %s69 = sphi 0, %s68
      %s83 = sphi 0, %s69
      %s87 = sphi 0, %s87
      %s89 = sphi 0, %s87
      %s90 = sphi 0, %s89
      %s104 = sphi 0, %s90
      %s108 = sphi 0, %s108
      %s110 = sphi 0, %s108
      %s111 = sphi 0, %s110
      %s125 = sphi 0, %s111
      %s129 = sphi 0, %s129
      %s131 = sphi 0, %s129
      %s132 = sphi 0, %s131
      %s146 = sphi 0, %s132
      %s150 = sphi 0, %s150
      %s152 = sphi 0, %s150
      %s153 = sphi 0, %s152
      %s167 = sphi 0, %s153
      %s171 = sphi 0, %s171
      %s173 = sphi 0, %s171
      %s174 = sphi 0, %s173
      %s188 = sphi 0, %s174
      %s196 = sphi 0, %s198
      %s199 = sphi 0, %s196
      %s200 = sphi 0, %s199
      %s216 = sphi 0, %s200
    $region4: #{tpu_custom_call.1} parent=1 // loop_header_branch
      %23 = sbr.rel (%p21) target = $region8
    $region5: #{tpu_custom_call.1} parent=1 // loop_body
      %s25 = ssub.s32 %s20, 1
      %s26 = ssub.s32 %s20, 2
      %s33 = sadd.s32 1, %s28
      %p34 = scmp.ge.s32.totalorder %s33, 1
      %s35 = scalar_select %p34, 0, %s33
      %s36 = sadd.s32 1, %s27
      %s37 = scalar_select %p34, %s36, %s27
      %p38 = scmp.ge.s32.totalorder %s37, 2
      %s39 = scalar_select %p38, 0, %s37
      %s40 = ssub.s32 %s27, %s39
      %p41 = scmp.eq.s32.totalorder %s40, 0
      %s43 = sadd.s32 %s42, 1
      %s44 = scalar_select %p41, %s42, %s43
      %p47 = pneg %p41
      %p48 = scmp.eq.s32.totalorder %s20, 1
      %p49 = por %p47, %p48
      %p50 = scmp.ne.s32.totalorder %s42, %s45
      %p51 = scmp.eq.s32.totalorder %s20, 0
      %p52 = por %p50, %p51
      %p53 = scmp.ne.s32.totalorder %s42, %s45
      %p54 = scmp.eq.s32.totalorder %s25, 1
      %p55 = por %p53, %p54
      %p56 = scmp.ne.s32.totalorder %s45, %s46
      %p57 = scmp.eq.s32.totalorder %s25, 0
      %p58 = por %p56, %p57
      %p59 = scmp.ne.s32.totalorder %s45, %s46
      %p60 = scmp.eq.s32.totalorder %s26, 1
      %p61 = por %p59, %p60
      %p63 = scmp.ne.s32.totalorder %s46, %s62
      %p64 = scmp.eq.s32.totalorder %s26, 0
      %p65 = por %p63, %p64
      %s67 = sadd.s32 %s66, 1
      %p70 = scmp.eq.s32.totalorder %s20, 1
      %p71 = scmp.ne.s32.totalorder %s66, %s68
      %p72 = scmp.eq.s32.totalorder %s20, 0
      %p73 = por %p71, %p72
      %p74 = scmp.ne.s32.totalorder %s66, %s68
      %p75 = scmp.eq.s32.totalorder %s25, 1
      %p76 = por %p74, %p75
      %p77 = scmp.ne.s32.totalorder %s68, %s69
      %p78 = scmp.eq.s32.totalorder %s25, 0
      %p79 = por %p77, %p78
      %p80 = scmp.ne.s32.totalorder %s68, %s69
      %p81 = scmp.eq.s32.totalorder %s26, 1
      %p82 = por %p80, %p81
      %p84 = scmp.ne.s32.totalorder %s69, %s83
      %p85 = scmp.eq.s32.totalorder %s26, 0
      %p86 = por %p84, %p85
      %s88 = sadd.s32 %s87, 1
      %p91 = scmp.eq.s32.totalorder %s20, 1
      %p92 = scmp.ne.s32.totalorder %s87, %s89
      %p93 = scmp.eq.s32.totalorder %s20, 0
      %p94 = por %p92, %p93
      %p95 = scmp.ne.s32.totalorder %s87, %s89
      %p96 = scmp.eq.s32.totalorder %s25, 1
      %p97 = por %p95, %p96
      %p98 = scmp.ne.s32.totalorder %s89, %s90
      %p99 = scmp.eq.s32.totalorder %s25, 0
      %p100 = por %p98, %p99
      %p101 = scmp.ne.s32.totalorder %s89, %s90
      %p102 = scmp.eq.s32.totalorder %s26, 1
      %p103 = por %p101, %p102
      %p105 = scmp.ne.s32.totalorder %s90, %s104
      %p106 = scmp.eq.s32.totalorder %s26, 0
      %p107 = por %p105, %p106
      %s109 = sadd.s32 %s108, 1
      %p112 = scmp.eq.s32.totalorder %s20, 1
      %p113 = scmp.ne.s32.totalorder %s108, %s110
      %p114 = scmp.eq.s32.totalorder %s20, 0
      %p115 = por %p113, %p114
      %p116 = scmp.ne.s32.totalorder %s108, %s110
      %p117 = scmp.eq.s32.totalorder %s25, 1
      %p118 = por %p116, %p117
      %p119 = scmp.ne.s32.totalorder %s110, %s111
      %p120 = scmp.eq.s32.totalorder %s25, 0
      %p121 = por %p119, %p120
      %p122 = scmp.ne.s32.totalorder %s110, %s111
      %p123 = scmp.eq.s32.totalorder %s26, 1
      %p124 = por %p122, %p123
      %p126 = scmp.ne.s32.totalorder %s111, %s125
      %p127 = scmp.eq.s32.totalorder %s26, 0
      %p128 = por %p126, %p127
      %s130 = sadd.s32 %s129, 1
      %p133 = scmp.eq.s32.totalorder %s20, 1
      %p134 = scmp.ne.s32.totalorder %s129, %s131
      %p135 = scmp.eq.s32.totalorder %s20, 0
      %p136 = por %p134, %p135
      %p137 = scmp.ne.s32.totalorder %s129, %s131
      %p138 = scmp.eq.s32.totalorder %s25, 1
      %p139 = por %p137, %p138
      %p140 = scmp.ne.s32.totalorder %s131, %s132
      %p141 = scmp.eq.s32.totalorder %s25, 0
      %p142 = por %p140, %p141
      %p143 = scmp.ne.s32.totalorder %s131, %s132
      %p144 = scmp.eq.s32.totalorder %s26, 1
      %p145 = por %p143, %p144
      %p147 = scmp.ne.s32.totalorder %s132, %s146
      %p148 = scmp.eq.s32.totalorder %s26, 0
      %p149 = por %p147, %p148
      %s151 = sadd.s32 %s150, 1
      %p154 = scmp.eq.s32.totalorder %s20, 1
      %p155 = scmp.ne.s32.totalorder %s150, %s152
      %p156 = scmp.eq.s32.totalorder %s20, 0
      %p157 = por %p155, %p156
      %p158 = scmp.ne.s32.totalorder %s150, %s152
      %p159 = scmp.eq.s32.totalorder %s25, 1
      %p160 = por %p158, %p159
      %p161 = scmp.ne.s32.totalorder %s152, %s153
      %p162 = scmp.eq.s32.totalorder %s25, 0
      %p163 = por %p161, %p162
      %p164 = scmp.ne.s32.totalorder %s152, %s153
      %p165 = scmp.eq.s32.totalorder %s26, 1
      %p166 = por %p164, %p165
      %p168 = scmp.ne.s32.totalorder %s153, %s167
      %p169 = scmp.eq.s32.totalorder %s26, 0
      %p170 = por %p168, %p169
      %s172 = sadd.s32 %s171, 1
      %p175 = scmp.eq.s32.totalorder %s20, 1
      %p176 = scmp.ne.s32.totalorder %s171, %s173
      %p177 = scmp.eq.s32.totalorder %s20, 0
      %p178 = por %p176, %p177
      %p179 = scmp.ne.s32.totalorder %s171, %s173
      %p180 = scmp.eq.s32.totalorder %s25, 1
      %p181 = por %p179, %p180
      %p182 = scmp.ne.s32.totalorder %s173, %s174
      %p183 = scmp.eq.s32.totalorder %s25, 0
      %p184 = por %p182, %p183
      %p185 = scmp.ne.s32.totalorder %s173, %s174
      %p186 = scmp.eq.s32.totalorder %s26, 1
      %p187 = por %p185, %p186
      %p189 = scmp.ne.s32.totalorder %s174, %s188
      %p190 = scmp.eq.s32.totalorder %s26, 0
      %p191 = por %p189, %p190
      %s192 = ssub.s32 %s27, %s39
      %s193 = ssub.s32 %s28, %s35
      %s194 = sor.u32 %s192, %s193
      %p195 = scmp.eq.s32.totalorder %s194, 0
      %s197 = sadd.s32 %s196, 1
      %s198 = scalar_select %p195, %s196, %s197
      %p201 = pneg %p195
      %p202 = scmp.eq.s32.totalorder %s20, 1
      %p203 = por %p201, %p202
      %p204 = scmp.ne.s32.totalorder %s196, %s199
      %p205 = scmp.eq.s32.totalorder %s20, 0
      %p206 = por %p204, %p205
      %p207 = scmp.ne.s32.totalorder %s196, %s199
      %p208 = scmp.eq.s32.totalorder %s25, 1
      %p209 = por %p207, %p208
      %p210 = scmp.ne.s32.totalorder %s199, %s200
      %p211 = scmp.eq.s32.totalorder %s25, 0
      %p212 = por %p210, %p211
      %p213 = scmp.ne.s32.totalorder %s199, %s200
      %p214 = scmp.eq.s32.totalorder %s26, 1
      %p215 = por %p213, %p214
      %p217 = scmp.ne.s32.totalorder %s200, %s216
      %p218 = scmp.eq.s32.totalorder %s26, 0
      %p219 = por %p217, %p218
      %p220 = scmp.le.s32.totalorder 1, %s20
      %p221 = scmp.lt.s32.totalorder %s20, 3
      %p222 = pnand %p220, %p221
      %p223 = pneg %p222
      // Predicated region
      $region9: #{tpu_custom_call.1} parent=5 // pred_check
        _
      $region10: #{tpu_custom_call.1} parent=5 // pred_check_branch
        %225 = sbr.rel (%p222) target = $region12
      $region11: #{tpu_custom_call.1} parent=5 // pred_region
        %s226 = ssub.s32 %s20, 1
        // Predicated region
        $region13: #{tpu_custom_call.1} parent=11 // pred_check
          %p227 = pneg %p79
        $region14: #{tpu_custom_call.1} parent=11 // pred_check_branch
          %229 = sbr.rel (%p227) target = $region16
        $region15: #{tpu_custom_call.1} parent=11 // pred_region
          %s231 = ssub.s32 512, 512
          %232 = vsyncadd [#allocation7], %s231
          %s233 = sshll.u32 [#allocation6], 4
          %s234 = int_to_ptr.vmem [resolvable:$true] %s233
          %239 = dma.hbm_to_vmem [thread:$0]  %s1, 512, %s234, [#allocation7], 128, 128, 8
        $region16: #{tpu_custom_call.1} parent=11 // pred_fallthru
          _
        // Predicated region
        $region17: #{tpu_custom_call.1} parent=11 // pred_check
          %p240 = pneg %p100
        $region18: #{tpu_custom_call.1} parent=11 // pred_check_branch
          %242 = sbr.rel (%p240) target = $region20
        $region19: #{tpu_custom_call.1} parent=11 // pred_region
          _
        $region20: #{tpu_custom_call.1} parent=11 // pred_fallthru
          _
        // Predicated region
        $region21: #{tpu_custom_call.1} parent=11 // pred_check
          %p243 = pneg %p121
        $region22: #{tpu_custom_call.1} parent=11 // pred_check_branch
          %245 = sbr.rel (%p243) target = $region24
        $region23: #{tpu_custom_call.1} parent=11 // pred_region
          _
        $region24: #{tpu_custom_call.1} parent=11 // pred_fallthru
          _
        // Predicated region
        $region25: #{tpu_custom_call.1} parent=11 // pred_check
          %p246 = pneg %p142
        $region26: #{tpu_custom_call.1} parent=11 // pred_check_branch
          %248 = sbr.rel (%p246) target = $region28
        $region27: #{tpu_custom_call.1} parent=11 // pred_region
          _
        $region28: #{tpu_custom_call.1} parent=11 // pred_fallthru
          _
        // Predicated region
        $region29: #{tpu_custom_call.1} parent=11 // pred_check
          %p249 = pneg %p163
        $region30: #{tpu_custom_call.1} parent=11 // pred_check_branch
          %251 = sbr.rel (%p249) target = $region32
        $region31: #{tpu_custom_call.1} parent=11 // pred_region
          %s253 = ssub.s32 1024, 1024
          %254 = vsyncadd [#allocation7], %s253
          %s255 = sshll.u32 [#allocation8], 4
          %s256 = int_to_ptr.vmem [resolvable:$true] %s255
          %261 = dma.hbm_to_vmem [thread:$0]  %s5, 1024, %s256, [#allocation7], 256, 256, 16
        $region32: #{tpu_custom_call.1} parent=11 // pred_fallthru
          _
        // Predicated region
        $region33: #{tpu_custom_call.1} parent=11 // pred_check
          %p262 = pneg %p184
        $region34: #{tpu_custom_call.1} parent=11 // pred_check_branch
          %264 = sbr.rel (%p262) target = $region36
        $region35: #{tpu_custom_call.1} parent=11 // pred_region
          _
        $region36: #{tpu_custom_call.1} parent=11 // pred_fallthru
          _
      $region12: #{tpu_custom_call.1} parent=5 // pred_fallthru
        _
      %p265 = scmp.lt.s32.totalorder %s20, 2
      // Predicated region
      $region37: #{tpu_custom_call.1} parent=5 // pred_check
        %p266 = pneg %p265
      $region38: #{tpu_custom_call.1} parent=5 // pred_check_branch
        %268 = sbr.rel (%p266) target = $region40
      $region39: #{tpu_custom_call.1} parent=5 // pred_region
        // Predicated region
        $region41: #{tpu_custom_call.1} parent=39 // pred_check
          %p269 = pneg %p52
        $region42: #{tpu_custom_call.1} parent=39 // pred_check_branch
          %271 = sbr.rel (%p269) target = $region44
        $region43: #{tpu_custom_call.1} parent=39 // pred_region
          %s272 = sand.u32 %s42, 1
          %s273 = scalar_lea.sflag [#allocation4], %s272
          %s274 = sand.u32 %s42, 1
          %s275 = smul.addr %s274, 8
          %s276 = scalar_lea.vmem [#allocation3], %s275
          %s278 = ssub.s32 128, 128
          %279 = vsyncadd %s273, %s278
          %s280 = smul.addr %s27, 128
          %s281 = scalar_lea.hbm %s0, %s280
          %s283 = sshll.u32 %s276, 4
          %s284 = int_to_ptr.vmem [resolvable:$true] %s283
          %286 = dma.hbm_to_vmem [thread:$0]  %s281, 128, %s284, %s273
        $region44: #{tpu_custom_call.1} parent=39 // pred_fallthru
          _
      $region40: #{tpu_custom_call.1} parent=5 // pred_fallthru
        _
      %p287 = scmp.le.s32.totalorder 1, %s20
      %p288 = scmp.lt.s32.totalorder %s20, 3
      %p289 = pnand %p287, %p288
      %p290 = pneg %p289
      // Predicated region
      $region45: #{tpu_custom_call.1} parent=5 // pred_check
        _
      $region46: #{tpu_custom_call.1} parent=5 // pred_check_branch
        %292 = sbr.rel (%p289) target = $region48
      $region47: #{tpu_custom_call.1} parent=5 // pred_region
        %s293 = ssub.s32 %s20, 1
        %s294 = sand.u32 %s45, 1
        %s295 = scalar_lea.sflag [#allocation4], %s294
        %s296 = sand.u32 %s45, 1
        %s297 = smul.addr %s296, 8
        %s298 = scalar_lea.vmem [#allocation3], %s297
        // Predicated region
        $region49: #{tpu_custom_call.1} parent=47 // pred_check
          %p299 = pneg %p58
        $region50: #{tpu_custom_call.1} parent=47 // pred_check_branch
          %301 = sbr.rel (%p299) target = $region52
        $region51: #{tpu_custom_call.1} parent=47 // pred_region
          %302 = dma.done %s295, 128
        $region52: #{tpu_custom_call.1} parent=47 // pred_fallthru
          _
        // Predicated region
        $region53: #{tpu_custom_call.1} parent=47 // pred_check
          %p303 = pneg %p79
        $region54: #{tpu_custom_call.1} parent=47 // pred_check_branch
          %305 = sbr.rel (%p303) target = $region56
        $region55: #{tpu_custom_call.1} parent=47 // pred_region
          %306 = dma.done [#allocation7], 512
        $region56: #{tpu_custom_call.1} parent=47 // pred_fallthru
          _
        // Predicated region
        $region57: #{tpu_custom_call.1} parent=47 // pred_check
          %p307 = pneg %p163
        $region58: #{tpu_custom_call.1} parent=47 // pred_check_branch
          %309 = sbr.rel (%p307) target = $region60
        $region59: #{tpu_custom_call.1} parent=47 // pred_region
          %310 = dma.done [#allocation7], 1024
        $region60: #{tpu_custom_call.1} parent=47 // pred_fallthru
          _
        %s311 = sand.u32 %s45, 1
        %s312 = scalar_lea.sflag [#allocation4], %s311
        %s313 = sand.u32 %s45, 1
        %s314 = smul.addr %s313, 8
        %s315 = scalar_lea.vmem [#allocation3], %s314
        %p316 = pneg %p58
        %p317 = pneg %p55
        %p318 = pneg %p79
        %p319 = pneg %p76
        %p320 = pneg %p100
        %p321 = pneg %p97
        %p322 = pneg %p121
        %p323 = pneg %p118
        %p324 = pneg %p142
        %p325 = pneg %p139
        %p326 = pneg %p163
        %p327 = pneg %p160
        %p328 = pneg %p184
        %p329 = pneg %p181
        %p330 = pneg %p212
        %p331 = pneg %p209
        %s332 = sand.u32 %s199, 1
        %s333 = scalar_lea.sflag [#allocation5], %s332
        %s334 = sand.u32 %s199, 1
        %s335 = smul.addr %s334, 16
        %s336 = scalar_lea.vmem [#allocation9], %s335
        %s337 = smul.u32 2, %s30
        %p338 = scmp.eq.s32.totalorder %s30, 0
        // Predicated region
        $region61: #{tpu_custom_call.1} parent=47 // pred_check
          %p339 = pneg %p338
        $region62: #{tpu_custom_call.1} parent=47 // pred_check_branch
          %341 = sbr.rel (%p339) target = $region64
        $region63: #{tpu_custom_call.1} parent=47 // pred_region
          %v342 = vld [vmem:[%s298] sm:$0xff]
          %v343 = vld [vmem:[#allocation6] sm:$0xff]
          %v344 = vld [vmem:[#allocation6 + $0x8] sm:$0xff]
          %v345 = vld [vmem:[#allocation6 + $0x10] sm:$0xff]
          %v346 = vld [vmem:[#allocation6 + $0x18] sm:$0xff]
          %v347 = vld [vmem:[%s2] sm:$0x1]
          %v349 = vlaneseq
          %v350 = vshrl.u32 %v349, 7
          %v351 = vsub.s32 0, %v350
          %v352 = vrot.slane %v347, %v351
          %vm354 = vcmask 261120
          %v356 = vsel %vm354, %v342, 0
          %358 = vmatprep.subr.mxu0 0.0
          %359 = vmatpush1.msra.mxu0 %v343
          %360 = vmatprep.subr.mxu0 0.0
          %361 = vmatpush1.msra.mxu0 %v344
          %362 = vmatprep.subr.mxu0 0.0
          %363 = vmatpush1.msra.mxu0 %v345
          %364 = vmatprep.subr.mxu0 0.0
          %365 = vmatpush1.msra.mxu0 %v346
          %366 = vmatprep.subr.mxu0 0.0
          %367 = vmatpush1.msra.mxu0 0.0
          %368 = vmatprep.subr.mxu0 0.0
          %369 = vmatpush1.msra.mxu0 0.0
          %370 = vmatprep.subr.mxu0 0.0
          %371 = vmatpush1.msra.mxu0 0.0
          %372 = vmatprep.subr.mxu0 0.0
          %373 = vmatpush1.msra.mxu0 0.0
          %374 = vmatprep.subr.mxu0 0.0
          %375 = vmatpush1.msra.mxu0 0.0
          %376 = vmatprep.subr.mxu0 0.0
          %377 = vmatpush1.msra.mxu0 0.0
          %378 = vmatprep.subr.mxu0 0.0
          %379 = vmatpush1.msra.mxu0 0.0
          %380 = vmatprep.subr.mxu0 0.0
          %381 = vmatpush1.msra.mxu0 0.0
          %382 = vmatprep.subr.mxu0 0.0
          %383 = vmatpush1.msra.mxu0 0.0
          %384 = vmatprep.subr.mxu0 0.0
          %385 = vmatpush1.msra.mxu0 0.0
          %386 = vmatprep.subr.mxu0 0.0
          %387 = vmatpush1.msra.mxu0 0.0
          %388 = vmatprep.subr.mxu0 0.0
          %389 = vmatpush1.msra.mxu0 0.0
          %390 = vmatprep.subr.mxu0 0.0
          %391 = vmatpush1.msra.mxu0 0.0
          %392 = vmatprep.subr.mxu0 0.0
          %393 = vmatpush1.msra.mxu0 0.0
          %394 = vmatprep.subr.mxu0 0.0
          %395 = vmatpush1.msra.mxu0 0.0
          %396 = vmatprep.subr.mxu0 0.0
          %397 = vmatpush1.msra.mxu0 0.0
          %398 = vmatprep.subr.mxu0 0.0
          %399 = vmatpush1.msra.mxu0 0.0
          %400 = vmatprep.subr.mxu0 0.0
          %401 = vmatpush1.msra.mxu0 0.0
          %402 = vmatprep.subr.mxu0 0.0
          %403 = vmatpush1.msra.mxu0 0.0
          %404 = vmatprep.subr.mxu0 0.0
          %405 = vmatpush1.msra.mxu0 0.0
          %406 = vmatprep.subr.mxu0 0.0
          %407 = vmatpush1.msra.mxu0 0.0
          %408 = vmatprep.subr.mxu0 0.0
          %409 = vmatpush1.msra.mxu0 0.0
          %410 = vmatprep.subr.mxu0 0.0
          %411 = vmatpush1.msra.mxu0 0.0
          %412 = vmatprep.subr.mxu0 0.0
          %413 = vmatpush1.msra.mxu0 0.0
          %414 = vmatprep.subr.mxu0 0.0
          %415 = vmatpush1.msra.mxu0 0.0
          %416 = vmatprep.subr.mxu0 0.0
          %417 = vmatpush1.msra.mxu0 0.0
          %418 = vmatprep.subr.mxu0 0.0
          %419 = vmatpush1.msra.mxu0 0.0
          %420 = vmatprep.subr.mxu0 0.0
          %421 = vmatpush1.msra.mxu0 0.0
          %422 = vmatprep.mubr.f32.mxu0 0.0
          %423 = vmatmul.mubr.f32.gmra.mrb[0].mxu0 %v356
          %v424 = vpop.f32.mrb[0].mxu0
          %v425 = vadd.f32 %v352, %v424
          %v426 = vpop.f32.mrb[0].mxu0
          %427 = vdwg.mxu0
          %v428 = vmul.f32 %v425, 0.5
          %v429 = vmul.f32 %v425, 0.70710677
          %v430 = verf.f32.pop %v429
          %v431 = vadd.f32 %v430, 1.0
          %v432 = vmul.f32 %v428, %v431
          %v433 = vsel %vm354, %v432, 0.0
          %434 = vadd.xlane.f32.xlu0 %v433
          %v435 = vpop.xlane.xlu0 %434
          %v436 = vrcp.pop 32.0
          %v437 = vmul.f32 %v435, %v436
          %v438 = vsub.f32 %v432, %v437
          %v439 = vmul.f32 %v438, %v438
          %v440 = vsel %vm354, %v439, 0.0
          %441 = vadd.xlane.f32.xlu0 %v440
          %v442 = vpop.xlane.xlu0 %441
          %v443 = vmul.f32 %v442, %v436
          %v444 = vadd.f32 %v443, 1e-12
          %v445 = vrsqrt.pop %v444
          %v446 = vmul.f32 %v438, %v445
          %v447 = vld [vmem:[%s3] sm:$0x1]
          %v449 = vlaneseq
          %v450 = vshrl.u32 %v449, 7
          %v451 = vsub.s32 0, %v450
          %v452 = vrot.slane %v447, %v451
          %v454 = vmul.f32 %v446, %v452
          %v455 = vld [vmem:[%s4] sm:$0x1]
          %v457 = vlaneseq
          %v458 = vshrl.u32 %v457, 7
          %v459 = vsub.s32 0, %v458
          %v460 = vrot.slane %v455, %v459
          %v462 = vadd.f32 %v454, %v460
          %463 = vst.msk [vmem:[#allocation2] sm:$0xff] %vm354, %v462
        $region64: #{tpu_custom_call.1} parent=47 // pred_fallthru
          _
        %s464 = smul.u32 %s30, 256
        %s465 = sshra.s32 %s464, 7
        %s466 = sand.u32 %s464, 127
        %s467 = smul.addr %s465, 8
        %s468 = scalar_lea.vmem [#allocation8], %s467
        %v469 = vld [vmem:[%s468] sm:$0xff]
        %v470 = vld [vmem:[%s468 + $0x8] sm:$0xff]
        %v471 = vld [vmem:[%s468 + $0x10] sm:$0xff]
        %v472 = vld [vmem:[%s468 + $0x18] sm:$0xff]
        %v473 = vld [vmem:[%s468 + $0x20] sm:$0xff]
        %v474 = vld [vmem:[%s468 + $0x28] sm:$0xff]
        %v475 = vld [vmem:[%s468 + $0x30] sm:$0xff]
        %v476 = vld [vmem:[%s468 + $0x38] sm:$0xff]
        %s477 = scalar_lea.vmem %s6, %s465
        %v478 = vld [vmem:[%s477] sm:$0x3]
        %v479 = vld [vmem:[#allocation2] sm:$0xff]
        %v481 = vlaneseq
        %v482 = vshrl.u32 %v481, 7
        %v483 = vsub.s32 0, %v482
        %v484 = vrot.slane %v478, %v483
        %v485 = vlaneseq
        %v486 = vshrl.u32 %v485, 7
        %v487 = vsub.s32 1, %v486
        %v488 = vrot.slane %v478, %v487
        %vm491 = vcmask 261120
        %v493 = vsel %vm491, %v479, 0
        %495 = vmatprep.subr.mxu0 %v470
        %496 = vmatpush1.msra.mxu0 %v469
        %497 = vmatprep.subr.mxu0 %v472
        %498 = vmatpush1.msra.mxu0 %v471
        %499 = vmatprep.subr.mxu0 %v474
        %500 = vmatpush1.msra.mxu0 %v473
        %501 = vmatprep.subr.mxu0 %v476
        %502 = vmatpush1.msra.mxu0 %v475
        %503 = vmatprep.subr.mxu0 0.0
        %504 = vmatpush1.msra.mxu0 0.0
        %505 = vmatprep.subr.mxu0 0.0
        %506 = vmatpush1.msra.mxu0 0.0
        %507 = vmatprep.subr.mxu0 0.0
        %508 = vmatpush1.msra.mxu0 0.0
        %509 = vmatprep.subr.mxu0 0.0
        %510 = vmatpush1.msra.mxu0 0.0
        %511 = vmatprep.subr.mxu0 0.0
        %512 = vmatpush1.msra.mxu0 0.0
        %513 = vmatprep.subr.mxu0 0.0
        %514 = vmatpush1.msra.mxu0 0.0
        %515 = vmatprep.subr.mxu0 0.0
        %516 = vmatpush1.msra.mxu0 0.0
        %517 = vmatprep.subr.mxu0 0.0
        %518 = vmatpush1.msra.mxu0 0.0
        %519 = vmatprep.subr.mxu0 0.0
        %520 = vmatpush1.msra.mxu0 0.0
        %521 = vmatprep.subr.mxu0 0.0
        %522 = vmatpush1.msra.mxu0 0.0
        %523 = vmatprep.subr.mxu0 0.0
        %524 = vmatpush1.msra.mxu0 0.0
        %525 = vmatprep.subr.mxu0 0.0
        %526 = vmatpush1.msra.mxu0 0.0
        %527 = vmatprep.subr.mxu0 0.0
        %528 = vmatpush1.msra.mxu0 0.0
        %529 = vmatprep.subr.mxu0 0.0
        %530 = vmatpush1.msra.mxu0 0.0
        %531 = vmatprep.subr.mxu0 0.0
        %532 = vmatpush1.msra.mxu0 0.0
        %533 = vmatprep.subr.mxu0 0.0
        %534 = vmatpush1.msra.mxu0 0.0
        %535 = vmatprep.subr.mxu0 0.0
        %536 = vmatpush1.msra.mxu0 0.0
        %537 = vmatprep.subr.mxu0 0.0
        %538 = vmatpush1.msra.mxu0 0.0
        %539 = vmatprep.subr.mxu0 0.0
        %540 = vmatpush1.msra.mxu0 0.0
        %541 = vmatprep.subr.mxu0 0.0
        %542 = vmatpush1.msra.mxu0 0.0
        %543 = vmatprep.subr.mxu0 0.0
        %544 = vmatpush1.msra.mxu0 0.0
        %545 = vmatprep.subr.mxu0 0.0
        %546 = vmatpush1.msra.mxu0 0.0
        %547 = vmatprep.subr.mxu0 0.0
        %548 = vmatpush1.msra.mxu0 0.0
        %549 = vmatprep.subr.mxu0 0.0
        %550 = vmatpush1.msra.mxu0 0.0
        %551 = vmatprep.subr.mxu0 0.0
        %552 = vmatpush1.msra.mxu0 0.0
        %553 = vmatprep.subr.mxu0 0.0
        %554 = vmatpush1.msra.mxu0 0.0
        %555 = vmatprep.subr.mxu0 0.0
        %556 = vmatpush1.msra.mxu0 0.0
        %557 = vmatprep.subr.mxu0 0.0
        %558 = vmatpush1.msra.mxu0 0.0
        %559 = vmatprep.mubr.f32.mxu0 0.0
        %560 = vmatmul.mubr.f32.gmra.mrb[0].mxu0 %v493
        %v561 = vpop.f32.mrb[0].mxu0
        %v562 = vadd.f32 %v484, %v561
        %v563 = vpop.f32.mrb[0].mxu0
        %v564 = vadd.f32 %v488, %v563
        %565 = vdwg.mxu0
        %566 = vst [vmem:[%s336] sm:$0xff] %v562
        %567 = vst [vmem:[%s336 + $0x8] sm:$0xff] %v564
        %s568 = sand.u32 %s199, 1
        %s569 = scalar_lea.sflag [#allocation5], %s568
        %s570 = sand.u32 %s199, 1
        %s571 = smul.addr %s570, 16
        %s572 = scalar_lea.vmem [#allocation9], %s571
        // Predicated region
        $region65: #{tpu_custom_call.1} parent=47 // pred_check
          %p573 = pneg %p209
        $region66: #{tpu_custom_call.1} parent=47 // pred_check_branch
          %575 = sbr.rel (%p573) target = $region68
        $region67: #{tpu_custom_call.1} parent=47 // pred_region
          %s576 = smul.u32 2, %s30
          %s578 = ssub.s32 256, 256
          %579 = vsyncadd %s569, %s578
          %s580 = smul.addr %s29, 2
          %s581 = sadd.s32 %s576, %s580
          %s582 = smul.addr %s581, 128
          %s583 = scalar_lea.hbm %s7, %s582
          %s585 = sshll.u32 %s572, 4
          %s586 = int_to_ptr.vmem [resolvable:$true] %s585
          %588 = dma.vmem_to_hbm [thread:$0]  %s586, 256, %s583, %s569
        $region68: #{tpu_custom_call.1} parent=47 // pred_fallthru
          _
      $region48: #{tpu_custom_call.1} parent=5 // pred_fallthru
        _
      %p589 = scmp.le.s32.totalorder 2, %s20
      // Predicated region
      $region69: #{tpu_custom_call.1} parent=5 // pred_check
        %p590 = pneg %p589
      $region70: #{tpu_custom_call.1} parent=5 // pred_check_branch
        %592 = sbr.rel (%p590) target = $region72
      $region71: #{tpu_custom_call.1} parent=5 // pred_region
        %s593 = ssub.s32 %s20, 2
        // Predicated region
        $region73: #{tpu_custom_call.1} parent=71 // pred_check
          %p594 = pneg %p215
        $region74: #{tpu_custom_call.1} parent=71 // pred_check_branch
          %596 = sbr.rel (%p594) target = $region76
        $region75: #{tpu_custom_call.1} parent=71 // pred_region
          %s597 = sand.u32 %s200, 1
          %s598 = scalar_lea.sflag [#allocation5], %s597
          %s599 = sand.u32 %s200, 1
          %s600 = smul.addr %s599, 16
          %s601 = scalar_lea.vmem [#allocation9], %s600
          %602 = dma.done %s598, 256
        $region76: #{tpu_custom_call.1} parent=71 // pred_fallthru
          _
      $region72: #{tpu_custom_call.1} parent=5 // pred_fallthru
        _
    $region6: #{tpu_custom_call.1} parent=1 // loop_footer
      %s24 = sadd.s32 1, %s20
    $region7: #{tpu_custom_call.1} parent=1 // loop_footer_branch
      %19 = sbr.rel target = $region3
    $region8: #{tpu_custom_call.1} parent=1 // loop_exit
      _
    %603 = vsyncpa [#allocation4], 1
    %s604 = scalar_lea.sflag [#allocation4], 1
    %605 = vsyncpa %s604, 1
    %606 = vsyncpa [#allocation7], 1
    %607 = vsyncpa [#allocation5], 1
    %s608 = scalar_lea.sflag [#allocation5], 1
    %609 = vsyncpa %s608, 1

// kernel: tpu_custom_call.1
$region0: #{tpu_custom_call.1}
  #allocation0 [shape = 'u32[]', space=smem, size = 0x4, offset = 0x4, fixed_abs, tag = 'smem constant byte address 0x4 - core index']
  #allocation1 [shape = 'u32[144,128]{1,0:T(1,128)}', space=vmem, size = 0x12000, scoped, tag = 'internal scratch']
  #allocation2 [shape = 'f32[8,32]{1,0:T(8,128)}', space=vmem, size = 0x1000, scoped, tag = 'scratch operand']
  %s0 = inlined_call_operand.hbm [shape: f32[16,32], index: 0, kind: input, shape index: {}]
  %s1 = inlined_call_operand.hbm [shape: f32[32,32], index: 1, kind: input, shape index: {}]
  %s2 = inlined_call_operand.vmem [shape: f32[1,32], index: 2, kind: input, shape index: {}]
  %s3 = inlined_call_operand.vmem [shape: f32[1,32], index: 3, kind: input, shape index: {}]
  %s4 = inlined_call_operand.vmem [shape: f32[1,32], index: 4, kind: input, shape index: {}]
  %s5 = inlined_call_operand.hbm [shape: f32[32,256], index: 5, kind: input, shape index: {}]
  %s6 = inlined_call_operand.vmem [shape: f32[1,256], index: 6, kind: input, shape index: {}]
  %s7 = inlined_call_operand.hbm [shape: f32[16,256], index: 7, kind: output, shape index: {}]
  %s8 = sld [smem:[#allocation0]]
  $region77: #{tpu_custom_call.1} parent=0
    _
  %s10 = ssub.s32 1, %s8
  %s11 = scalar_select 0, %s10, %s8
  $region1: #{tpu_custom_call.1} parent=0
    #allocation3 [shape = 'u8[8192]{0}', space=vmem, size = 0x2000, scoped, tag = 'input window, operand 0']
    #allocation4 [shape = 's32[2]{0}', space=sflag, size = 0x8, scoped, tag = 'scoped memory for tpu_custom_call.1']
    #allocation5 [shape = 's32[2]{0}', space=sflag, size = 0x8, scoped, tag = 'scoped memory for tpu_custom_call.1']
    #allocation6 [shape = 'u8[16384]{0}', space=vmem, size = 0x4000, scoped, tag = 'input window, operand 1, single buffered']
    #allocation7 [shape = 's32[1]{0}', space=sflag, size = 0x4, scoped, tag = 'scoped memory for tpu_custom_call.1']
    #allocation8 [shape = 'u8[32768]{0}', space=vmem, size = 0x8000, scoped, tag = 'input window, operand 5, single buffered']
    #allocation9 [shape = 'u8[16384]{0}', space=vmem, size = 0x4000, scoped, tag = 'output window, operand 0']
    %12 = vsyncpa [#allocation4], 0
    %s13 = scalar_lea.sflag [#allocation4], 1
    %14 = vsyncpa %s13, 0
    %15 = vsyncpa [#allocation7], 0
    %16 = vsyncpa [#allocation5], 0
    %s17 = scalar_lea.sflag [#allocation5], 1
    %18 = vsyncpa %s17, 0
    loop: start=0, step=1, limit=4
    $region2: #{tpu_custom_call.1} parent=1 // loop_pre_header
      _
    $region3: #{tpu_custom_call.1} parent=1 // loop_header
      %s20 = sphi 0, %s24
      %p21 = scmp.ge.s32.totalorder %s20, 4
      %s27 = sphi 0, %s39
      %s28 = sphi 0, %s35
      %s29 = sphi 0, %s27
      %s30 = sphi 0, %s28
      %s31 = sphi 0, %s29
      %s32 = sphi 0, %s30
      %s42 = sphi 0, %s44
      %s45 = sphi 0, %s42
      %s46 = sphi 0, %s45
      %s62 = sphi 0, %s46
      %s66 = sphi 0, %s66
      %s68 = sphi 0, %s66
      %s69 = sphi 0, %s68
      %s83 = sphi 0, %s69
      %s87 = sphi 0, %s87
      %s89 = sphi 0, %s87
      %s90 = sphi 0, %s89
      %s104 = sphi 0, %s90
      %s108 = sphi 0, %s108
      %s110 = sphi 0, %s108
      %s111 = sphi 0, %s110
      %s125 = sphi 0, %s111
      %s129 = sphi 0, %s129
      %s131 = sphi 0, %s129
      %s132 = sphi 0, %s131
      %s146 = sphi 0, %s132
      %s152 = sphi 0, %s154
      %s155 = sphi 0, %s152
      %s156 = sphi 0, %s155
      %s172 = sphi 0, %s156
      %s178 = sphi 0, %s180
      %s181 = sphi 0, %s178
      %s182 = sphi 0, %s181
      %s198 = sphi 0, %s182
      %s206 = sphi 0, %s208
      %s209 = sphi 0, %s206
      %s210 = sphi 0, %s209
      %s226 = sphi 0, %s210
    $region4: #{tpu_custom_call.1} parent=1 // loop_header_branch
      %23 = sbr.rel (%p21) target = $region8
    $region5: #{tpu_custom_call.1} parent=1 // loop_body
      %s25 = ssub.s32 %s20, 1
      %s26 = ssub.s32 %s20, 2
      %s33 = sadd.s32 1, %s28
      %p34 = scmp.ge.s32.totalorder %s33, 1
      %s35 = scalar_select %p34, 0, %s33
      %s36 = sadd.s32 1, %s27
      %s37 = scalar_select %p34, %s36, %s27
      %p38 = scmp.ge.s32.totalorder %s37, 2
      %s39 = scalar_select %p38, 0, %s37
      %s40 = ssub.s32 %s27, %s39
      %p41 = scmp.eq.s32.totalorder %s40, 0
      %s43 = sadd.s32 %s42, 1
      %s44 = scalar_select %p41, %s42, %s43
      %p47 = pneg %p41
      %p48 = scmp.eq.s32.totalorder %s20, 1
      %p49 = por %p47, %p48
      %p50 = scmp.ne.s32.totalorder %s42, %s45
      %p51 = scmp.eq.s32.totalorder %s20, 0
      %p52 = por %p50, %p51
      %p53 = scmp.ne.s32.totalorder %s42, %s45
      %p54 = scmp.eq.s32.totalorder %s25, 1
      %p55 = por %p53, %p54
      %p56 = scmp.ne.s32.totalorder %s45, %s46
      %p57 = scmp.eq.s32.totalorder %s25, 0
      %p58 = por %p56, %p57
      %p59 = scmp.ne.s32.totalorder %s45, %s46
      %p60 = scmp.eq.s32.totalorder %s26, 1
      %p61 = por %p59, %p60
      %p63 = scmp.ne.s32.totalorder %s46, %s62
      %p64 = scmp.eq.s32.totalorder %s26, 0
      %p65 = por %p63, %p64
      %s67 = sadd.s32 %s66, 1
      %p70 = scmp.eq.s32.totalorder %s20, 1
      %p71 = scmp.ne.s32.totalorder %s66, %s68
      %p72 = scmp.eq.s32.totalorder %s20, 0
      %p73 = por %p71, %p72
      %p74 = scmp.ne.s32.totalorder %s66, %s68
      %p75 = scmp.eq.s32.totalorder %s25, 1
      %p76 = por %p74, %p75
      %p77 = scmp.ne.s32.totalorder %s68, %s69
      %p78 = scmp.eq.s32.totalorder %s25, 0
      %p79 = por %p77, %p78
      %p80 = scmp.ne.s32.totalorder %s68, %s69
      %p81 = scmp.eq.s32.totalorder %s26, 1
      %p82 = por %p80, %p81
      %p84 = scmp.ne.s32.totalorder %s69, %s83
      %p85 = scmp.eq.s32.totalorder %s26, 0
      %p86 = por %p84, %p85
      %s88 = sadd.s32 %s87, 1
      %p91 = scmp.eq.s32.totalorder %s20, 1
      %p92 = scmp.ne.s32.totalorder %s87, %s89
      %p93 = scmp.eq.s32.totalorder %s20, 0
      %p94 = por %p92, %p93
      %p95 = scmp.ne.s32.totalorder %s87, %s89
      %p96 = scmp.eq.s32.totalorder %s25, 1
      %p97 = por %p95, %p96
      %p98 = scmp.ne.s32.totalorder %s89, %s90
      %p99 = scmp.eq.s32.totalorder %s25, 0
      %p100 = por %p98, %p99
      %p101 = scmp.ne.s32.totalorder %s89, %s90
      %p102 = scmp.eq.s32.totalorder %s26, 1
      %p103 = por %p101, %p102
      %p105 = scmp.ne.s32.totalorder %s90, %s104
      %p106 = scmp.eq.s32.totalorder %s26, 0
      %p107 = por %p105, %p106
      %s109 = sadd.s32 %s108, 1
      %p112 = scmp.eq.s32.totalorder %s20, 1
      %p113 = scmp.ne.s32.totalorder %s108, %s110
      %p114 = scmp.eq.s32.totalorder %s20, 0
      %p115 = por %p113, %p114
      %p116 = scmp.ne.s32.totalorder %s108, %s110
      %p117 = scmp.eq.s32.totalorder %s25, 1
      %p118 = por %p116, %p117
      %p119 = scmp.ne.s32.totalorder %s110, %s111
      %p120 = scmp.eq.s32.totalorder %s25, 0
      %p121 = por %p119, %p120
      %p122 = scmp.ne.s32.totalorder %s110, %s111
      %p123 = scmp.eq.s32.totalorder %s26, 1
      %p124 = por %p122, %p123
      %p126 = scmp.ne.s32.totalorder %s111, %s125
      %p127 = scmp.eq.s32.totalorder %s26, 0
      %p128 = por %p126, %p127
      %s130 = sadd.s32 %s129, 1
      %p133 = scmp.eq.s32.totalorder %s20, 1
      %p134 = scmp.ne.s32.totalorder %s129, %s131
      %p135 = scmp.eq.s32.totalorder %s20, 0
      %p136 = por %p134, %p135
      %p137 = scmp.ne.s32.totalorder %s129, %s131
      %p138 = scmp.eq.s32.totalorder %s25, 1
      %p139 = por %p137, %p138
      %p140 = scmp.ne.s32.totalorder %s131, %s132
      %p141 = scmp.eq.s32.totalorder %s25, 0
      %p142 = por %p140, %p141
      %p143 = scmp.ne.s32.totalorder %s131, %s132
      %p144 = scmp.eq.s32.totalorder %s26, 1
      %p145 = por %p143, %p144
      %p147 = scmp.ne.s32.totalorder %s132, %s146
      %p148 = scmp.eq.s32.totalorder %s26, 0
      %p149 = por %p147, %p148
      %s150 = ssub.s32 %s28, %s35
      %p151 = scmp.eq.s32.totalorder %s150, 0
      %s153 = sadd.s32 %s152, 1
      %s154 = scalar_select %p151, %s152, %s153
      %p157 = pneg %p151
      %p158 = scmp.eq.s32.totalorder %s20, 1
      %p159 = por %p157, %p158
      %p160 = scmp.ne.s32.totalorder %s152, %s155
      %p161 = scmp.eq.s32.totalorder %s20, 0
      %p162 = por %p160, %p161
      %p163 = scmp.ne.s32.totalorder %s152, %s155
      %p164 = scmp.eq.s32.totalorder %s25, 1
      %p165 = por %p163, %p164
      %p166 = scmp.ne.s32.totalorder %s155, %s156
      %p167 = scmp.eq.s32.totalorder %s25, 0
      %p168 = por %p166, %p167
      %p169 = scmp.ne.s32.totalorder %s155, %s156
      %p170 = scmp.eq.s32.totalorder %s26, 1
      %p171 = por %p169, %p170
      %p173 = scmp.ne.s32.totalorder %s156, %s172
      %p174 = scmp.eq.s32.totalorder %s26, 0
      %p175 = por %p173, %p174
      %s176 = ssub.s32 %s28, %s35
      %p177 = scmp.eq.s32.totalorder %s176, 0
      %s179 = sadd.s32 %s178, 1
      %s180 = scalar_select %p177, %s178, %s179
      %p183 = pneg %p177
      %p184 = scmp.eq.s32.totalorder %s20, 1
      %p185 = por %p183, %p184
      %p186 = scmp.ne.s32.totalorder %s178, %s181
      %p187 = scmp.eq.s32.totalorder %s20, 0
      %p188 = por %p186, %p187
      %p189 = scmp.ne.s32.totalorder %s178, %s181
      %p190 = scmp.eq.s32.totalorder %s25, 1
      %p191 = por %p189, %p190
      %p192 = scmp.ne.s32.totalorder %s181, %s182
      %p193 = scmp.eq.s32.totalorder %s25, 0
      %p194 = por %p192, %p193
      %p195 = scmp.ne.s32.totalorder %s181, %s182
      %p196 = scmp.eq.s32.totalorder %s26, 1
      %p197 = por %p195, %p196
      %p199 = scmp.ne.s32.totalorder %s182, %s198
      %p200 = scmp.eq.s32.totalorder %s26, 0
      %p201 = por %p199, %p200
      %s202 = ssub.s32 %s27, %s39
      %s203 = ssub.s32 %s28, %s35
      %s204 = sor.u32 %s202, %s203
      %p205 = scmp.eq.s32.totalorder %s204, 0
      %s207 = sadd.s32 %s206, 1
      %s208 = scalar_select %p205, %s206, %s207
      %p211 = pneg %p205
      %p212 = scmp.eq.s32.totalorder %s20, 1
      %p213 = por %p211, %p212
      %p214 = scmp.ne.s32.totalorder %s206, %s209
      %p215 = scmp.eq.s32.totalorder %s20, 0
      %p216 = por %p214, %p215
      %p217 = scmp.ne.s32.totalorder %s206, %s209
      %p218 = scmp.eq.s32.totalorder %s25, 1
      %p219 = por %p217, %p218
      %p220 = scmp.ne.s32.totalorder %s209, %s210
      %p221 = scmp.eq.s32.totalorder %s25, 0
      %p222 = por %p220, %p221
      %p223 = scmp.ne.s32.totalorder %s209, %s210
      %p224 = scmp.eq.s32.totalorder %s26, 1
      %p225 = por %p223, %p224
      %p227 = scmp.ne.s32.totalorder %s210, %s226
      %p228 = scmp.eq.s32.totalorder %s26, 0
      %p229 = por %p227, %p228
      %p230 = scmp.le.s32.totalorder 1, %s20
      %p231 = scmp.lt.s32.totalorder %s20, 3
      %p232 = pnand %p230, %p231
      %p233 = pneg %p232
      // Predicated region
      $region9: #{tpu_custom_call.1} parent=5 // pred_check
        _
      $region10: #{tpu_custom_call.1} parent=5 // pred_check_branch
        %235 = sbr.rel (%p232) target = $region12
      $region11: #{tpu_custom_call.1} parent=5 // pred_region
        %s236 = ssub.s32 %s20, 1
        // Predicated region
        $region13: #{tpu_custom_call.1} parent=11 // pred_check
          %p237 = pneg %p79
        $region14: #{tpu_custom_call.1} parent=11 // pred_check_branch
          %239 = sbr.rel (%p237) target = $region16
        $region15: #{tpu_custom_call.1} parent=11 // pred_region
          %s241 = ssub.s32 512, 512
          %242 = vsyncadd [#allocation7], %s241
          %s243 = sshll.u32 [#allocation6], 4
          %s244 = int_to_ptr.vmem [resolvable:$true] %s243
          %249 = dma.hbm_to_vmem [thread:$0]  %s1, 512, %s244, [#allocation7], 128, 128, 8
        $region16: #{tpu_custom_call.1} parent=11 // pred_fallthru
          _
        // Predicated region
        $region17: #{tpu_custom_call.1} parent=11 // pred_check
          %p250 = pneg %p100
        $region18: #{tpu_custom_call.1} parent=11 // pred_check_branch
          %252 = sbr.rel (%p250) target = $region20
        $region19: #{tpu_custom_call.1} parent=11 // pred_region
          _
        $region20: #{tpu_custom_call.1} parent=11 // pred_fallthru
          _
        // Predicated region
        $region21: #{tpu_custom_call.1} parent=11 // pred_check
          %p253 = pneg %p121
        $region22: #{tpu_custom_call.1} parent=11 // pred_check_branch
          %255 = sbr.rel (%p253) target = $region24
        $region23: #{tpu_custom_call.1} parent=11 // pred_region
          _
        $region24: #{tpu_custom_call.1} parent=11 // pred_fallthru
          _
        // Predicated region
        $region25: #{tpu_custom_call.1} parent=11 // pred_check
          %p256 = pneg %p142
        $region26: #{tpu_custom_call.1} parent=11 // pred_check_branch
          %258 = sbr.rel (%p256) target = $region28
        $region27: #{tpu_custom_call.1} parent=11 // pred_region
          _
        $region28: #{tpu_custom_call.1} parent=11 // pred_fallthru
          _
        // Predicated region
        $region29: #{tpu_custom_call.1} parent=11 // pred_check
          %p259 = pneg %p168
        $region30: #{tpu_custom_call.1} parent=11 // pred_check_branch
          %261 = sbr.rel (%p259) target = $region32
        $region31: #{tpu_custom_call.1} parent=11 // pred_region
          %s262 = smul.u32 2, %s30
          %s264 = ssub.s32 1024, 1024
          %265 = vsyncadd [#allocation7], %s264
          %s266 = smul.addr %s262, 128
          %s267 = scalar_lea.hbm %s5, %s266
          %s268 = sshll.u32 [#allocation8], 4
          %s269 = int_to_ptr.vmem [resolvable:$true] %s268
          %274 = dma.hbm_to_vmem [thread:$0]  %s267, 1024, %s269, [#allocation7], 256, 256, 16
        $region32: #{tpu_custom_call.1} parent=11 // pred_fallthru
          _
        // Predicated region
        $region33: #{tpu_custom_call.1} parent=11 // pred_check
          %p275 = pneg %p194
        $region34: #{tpu_custom_call.1} parent=11 // pred_check_branch
          %277 = sbr.rel (%p275) target = $region36
        $region35: #{tpu_custom_call.1} parent=11 // pred_region
          %s278 = smul.u32 2, %s30
          %p279 = scmp.lt.s32.totalorder %s278, 1
          %s280 = scalar_select %p279, %s278, 1
          %s281 = scalar_lea.vmem %s6, %s280
          %s282 = smul.u32 2, %s30
        $region36: #{tpu_custom_call.1} parent=11 // pred_fallthru
          _
      $region12: #{tpu_custom_call.1} parent=5 // pred_fallthru
        _
      %p283 = scmp.lt.s32.totalorder %s20, 2
      // Predicated region
      $region37: #{tpu_custom_call.1} parent=5 // pred_check
        %p284 = pneg %p283
      $region38: #{tpu_custom_call.1} parent=5 // pred_check_branch
        %286 = sbr.rel (%p284) target = $region40
      $region39: #{tpu_custom_call.1} parent=5 // pred_region
        // Predicated region
        $region41: #{tpu_custom_call.1} parent=39 // pred_check
          %p287 = pneg %p52
        $region42: #{tpu_custom_call.1} parent=39 // pred_check_branch
          %289 = sbr.rel (%p287) target = $region44
        $region43: #{tpu_custom_call.1} parent=39 // pred_region
          %s290 = sand.u32 %s42, 1
          %s291 = scalar_lea.sflag [#allocation4], %s290
          %s292 = sand.u32 %s42, 1
          %s293 = smul.addr %s292, 8
          %s294 = scalar_lea.vmem [#allocation3], %s293
          %s296 = ssub.s32 128, 128
          %297 = vsyncadd %s291, %s296
          %s298 = smul.addr %s27, 128
          %s299 = scalar_lea.hbm %s0, %s298
          %s301 = sshll.u32 %s294, 4
          %s302 = int_to_ptr.vmem [resolvable:$true] %s301
          %304 = dma.hbm_to_vmem [thread:$0]  %s299, 128, %s302, %s291
        $region44: #{tpu_custom_call.1} parent=39 // pred_fallthru
          _
      $region40: #{tpu_custom_call.1} parent=5 // pred_fallthru
        _
      %p305 = scmp.le.s32.totalorder 1, %s20
      %p306 = scmp.lt.s32.totalorder %s20, 3
      %p307 = pnand %p305, %p306
      %p308 = pneg %p307
      // Predicated region
      $region45: #{tpu_custom_call.1} parent=5 // pred_check
        _
      $region46: #{tpu_custom_call.1} parent=5 // pred_check_branch
        %310 = sbr.rel (%p307) target = $region48
      $region47: #{tpu_custom_call.1} parent=5 // pred_region
        %s311 = ssub.s32 %s20, 1
        %s312 = sand.u32 %s45, 1
        %s313 = scalar_lea.sflag [#allocation4], %s312
        %s314 = sand.u32 %s45, 1
        %s315 = smul.addr %s314, 8
        %s316 = scalar_lea.vmem [#allocation3], %s315
        // Predicated region
        $region49: #{tpu_custom_call.1} parent=47 // pred_check
          %p317 = pneg %p58
        $region50: #{tpu_custom_call.1} parent=47 // pred_check_branch
          %319 = sbr.rel (%p317) target = $region52
        $region51: #{tpu_custom_call.1} parent=47 // pred_region
          %320 = dma.done %s313, 128
        $region52: #{tpu_custom_call.1} parent=47 // pred_fallthru
          _
        // Predicated region
        $region53: #{tpu_custom_call.1} parent=47 // pred_check
          %p321 = pneg %p79
        $region54: #{tpu_custom_call.1} parent=47 // pred_check_branch
          %323 = sbr.rel (%p321) target = $region56
        $region55: #{tpu_custom_call.1} parent=47 // pred_region
          %324 = dma.done [#allocation7], 512
        $region56: #{tpu_custom_call.1} parent=47 // pred_fallthru
          _
        // Predicated region
        $region57: #{tpu_custom_call.1} parent=47 // pred_check
          %p325 = pneg %p168
        $region58: #{tpu_custom_call.1} parent=47 // pred_check_branch
          %327 = sbr.rel (%p325) target = $region60
        $region59: #{tpu_custom_call.1} parent=47 // pred_region
          %328 = dma.done [#allocation7], 1024
        $region60: #{tpu_custom_call.1} parent=47 // pred_fallthru
          _
        %s329 = sand.u32 %s45, 1
        %s330 = scalar_lea.sflag [#allocation4], %s329
        %s331 = sand.u32 %s45, 1
        %s332 = smul.addr %s331, 8
        %s333 = scalar_lea.vmem [#allocation3], %s332
        %p334 = pneg %p58
        %p335 = pneg %p55
        %p336 = pneg %p79
        %p337 = pneg %p76
        %p338 = pneg %p100
        %p339 = pneg %p97
        %p340 = pneg %p121
        %p341 = pneg %p118
        %p342 = pneg %p142
        %p343 = pneg %p139
        %p344 = pneg %p168
        %p345 = pneg %p165
        %s346 = smul.u32 2, %s30
        %p347 = scmp.lt.s32.totalorder %s346, 1
        %s348 = scalar_select %p347, %s346, 1
        %s349 = scalar_lea.vmem %s6, %s348
        %p350 = pneg %p194
        %p351 = pneg %p191
        %p352 = pneg %p222
        %p353 = pneg %p219
        %s354 = sand.u32 %s209, 1
        %s355 = scalar_lea.sflag [#allocation5], %s354
        %s356 = sand.u32 %s209, 1
        %s357 = smul.addr %s356, 16
        %s358 = scalar_lea.vmem [#allocation9], %s357
        %s359 = smul.u32 2, %s30
        %s360 = smul.u32 2, %s30
        %p361 = scmp.lt.s32.totalorder %s360, 1
        %s362 = scalar_select %p361, %s360, 1
        %s363 = scalar_lea.vmem %s6, %s362
        %s364 = smul.u32 2, %s30
        %s365 = smul.u32 2, %s30
        %p366 = scmp.eq.s32.totalorder %s30, 0
        // Predicated region
        $region61: #{tpu_custom_call.1} parent=47 // pred_check
          %p367 = pneg %p366
        $region62: #{tpu_custom_call.1} parent=47 // pred_check_branch
          %369 = sbr.rel (%p367) target = $region64
        $region63: #{tpu_custom_call.1} parent=47 // pred_region
          %v370 = vld [vmem:[%s316] sm:$0xff]
          %v371 = vld [vmem:[#allocation6] sm:$0xff]
          %v372 = vld [vmem:[#allocation6 + $0x8] sm:$0xff]
          %v373 = vld [vmem:[#allocation6 + $0x10] sm:$0xff]
          %v374 = vld [vmem:[#allocation6 + $0x18] sm:$0xff]
          %v375 = vld [vmem:[%s2] sm:$0x1]
          %v377 = vlaneseq
          %v378 = vshrl.u32 %v377, 7
          %v379 = vsub.s32 0, %v378
          %v380 = vrot.slane %v375, %v379
          %vm382 = vcmask 261120
          %v384 = vsel %vm382, %v370, 0
          %386 = vmatprep.subr.mxu0 0.0
          %387 = vmatpush1.msra.mxu0 %v371
          %388 = vmatprep.subr.mxu0 0.0
          %389 = vmatpush1.msra.mxu0 %v372
          %390 = vmatprep.subr.mxu0 0.0
          %391 = vmatpush1.msra.mxu0 %v373
          %392 = vmatprep.subr.mxu0 0.0
          %393 = vmatpush1.msra.mxu0 %v374
          %394 = vmatprep.subr.mxu0 0.0
          %395 = vmatpush1.msra.mxu0 0.0
          %396 = vmatprep.subr.mxu0 0.0
          %397 = vmatpush1.msra.mxu0 0.0
          %398 = vmatprep.subr.mxu0 0.0
          %399 = vmatpush1.msra.mxu0 0.0
          %400 = vmatprep.subr.mxu0 0.0
          %401 = vmatpush1.msra.mxu0 0.0
          %402 = vmatprep.subr.mxu0 0.0
          %403 = vmatpush1.msra.mxu0 0.0
          %404 = vmatprep.subr.mxu0 0.0
          %405 = vmatpush1.msra.mxu0 0.0
          %406 = vmatprep.subr.mxu0 0.0
          %407 = vmatpush1.msra.mxu0 0.0
          %408 = vmatprep.subr.mxu0 0.0
          %409 = vmatpush1.msra.mxu0 0.0
          %410 = vmatprep.subr.mxu0 0.0
          %411 = vmatpush1.msra.mxu0 0.0
          %412 = vmatprep.subr.mxu0 0.0
          %413 = vmatpush1.msra.mxu0 0.0
          %414 = vmatprep.subr.mxu0 0.0
          %415 = vmatpush1.msra.mxu0 0.0
          %416 = vmatprep.subr.mxu0 0.0
          %417 = vmatpush1.msra.mxu0 0.0
          %418 = vmatprep.subr.mxu0 0.0
          %419 = vmatpush1.msra.mxu0 0.0
          %420 = vmatprep.subr.mxu0 0.0
          %421 = vmatpush1.msra.mxu0 0.0
          %422 = vmatprep.subr.mxu0 0.0
          %423 = vmatpush1.msra.mxu0 0.0
          %424 = vmatprep.subr.mxu0 0.0
          %425 = vmatpush1.msra.mxu0 0.0
          %426 = vmatprep.subr.mxu0 0.0
          %427 = vmatpush1.msra.mxu0 0.0
          %428 = vmatprep.subr.mxu0 0.0
          %429 = vmatpush1.msra.mxu0 0.0
          %430 = vmatprep.subr.mxu0 0.0
          %431 = vmatpush1.msra.mxu0 0.0
          %432 = vmatprep.subr.mxu0 0.0
          %433 = vmatpush1.msra.mxu0 0.0
          %434 = vmatprep.subr.mxu0 0.0
          %435 = vmatpush1.msra.mxu0 0.0
          %436 = vmatprep.subr.mxu0 0.0
          %437 = vmatpush1.msra.mxu0 0.0
          %438 = vmatprep.subr.mxu0 0.0
          %439 = vmatpush1.msra.mxu0 0.0
          %440 = vmatprep.subr.mxu0 0.0
          %441 = vmatpush1.msra.mxu0 0.0
          %442 = vmatprep.subr.mxu0 0.0
          %443 = vmatpush1.msra.mxu0 0.0
          %444 = vmatprep.subr.mxu0 0.0
          %445 = vmatpush1.msra.mxu0 0.0
          %446 = vmatprep.subr.mxu0 0.0
          %447 = vmatpush1.msra.mxu0 0.0
          %448 = vmatprep.subr.mxu0 0.0
          %449 = vmatpush1.msra.mxu0 0.0
          %450 = vmatprep.mubr.f32.mxu0 0.0
          %451 = vmatmul.mubr.f32.gmra.mrb[0].mxu0 %v384
          %v452 = vpop.f32.mrb[0].mxu0
          %v453 = vadd.f32 %v380, %v452
          %v454 = vpop.f32.mrb[0].mxu0
          %455 = vdwg.mxu0
          %v456 = vmul.f32 %v453, 0.5
          %v457 = vmul.f32 %v453, 0.70710677
          %v458 = verf.f32.pop %v457
          %v459 = vadd.f32 %v458, 1.0
          %v460 = vmul.f32 %v456, %v459
          %v461 = vsel %vm382, %v460, 0.0
          %462 = vadd.xlane.f32.xlu0 %v461
          %v463 = vpop.xlane.xlu0 %462
          %v464 = vrcp.pop 32.0
          %v465 = vmul.f32 %v463, %v464
          %v466 = vsub.f32 %v460, %v465
          %v467 = vmul.f32 %v466, %v466
          %v468 = vsel %vm382, %v467, 0.0
          %469 = vadd.xlane.f32.xlu0 %v468
          %v470 = vpop.xlane.xlu0 %469
          %v471 = vmul.f32 %v470, %v464
          %v472 = vadd.f32 %v471, 1e-12
          %v473 = vrsqrt.pop %v472
          %v474 = vmul.f32 %v466, %v473
          %v475 = vld [vmem:[%s3] sm:$0x1]
          %v477 = vlaneseq
          %v478 = vshrl.u32 %v477, 7
          %v479 = vsub.s32 0, %v478
          %v480 = vrot.slane %v475, %v479
          %v482 = vmul.f32 %v474, %v480
          %v483 = vld [vmem:[%s4] sm:$0x1]
          %v485 = vlaneseq
          %v486 = vshrl.u32 %v485, 7
          %v487 = vsub.s32 0, %v486
          %v488 = vrot.slane %v483, %v487
          %v490 = vadd.f32 %v482, %v488
          %491 = vst.msk [vmem:[#allocation2] sm:$0xff] %vm382, %v490
        $region64: #{tpu_custom_call.1} parent=47 // pred_fallthru
          _
        %v492 = vld [vmem:[#allocation8] sm:$0xff]
        %v493 = vld [vmem:[#allocation8 + $0x8] sm:$0xff]
        %v494 = vld [vmem:[#allocation8 + $0x10] sm:$0xff]
        %v495 = vld [vmem:[#allocation8 + $0x18] sm:$0xff]
        %v496 = vld [vmem:[#allocation8 + $0x20] sm:$0xff]
        %v497 = vld [vmem:[#allocation8 + $0x28] sm:$0xff]
        %v498 = vld [vmem:[#allocation8 + $0x30] sm:$0xff]
        %v499 = vld [vmem:[#allocation8 + $0x38] sm:$0xff]
        %v500 = vld [vmem:[%s363] sm:$0x3]
        %v501 = vld [vmem:[#allocation2] sm:$0xff]
        %v503 = vlaneseq
        %v504 = vshrl.u32 %v503, 7
        %v505 = vsub.s32 0, %v504
        %v506 = vrot.slane %v500, %v505
        %v507 = vlaneseq
        %v508 = vshrl.u32 %v507, 7
        %v509 = vsub.s32 1, %v508
        %v510 = vrot.slane %v500, %v509
        %vm513 = vcmask 261120
        %v515 = vsel %vm513, %v501, 0
        %517 = vmatprep.subr.mxu0 %v493
        %518 = vmatpush1.msra.mxu0 %v492
        %519 = vmatprep.subr.mxu0 %v495
        %520 = vmatpush1.msra.mxu0 %v494
        %521 = vmatprep.subr.mxu0 %v497
        %522 = vmatpush1.msra.mxu0 %v496
        %523 = vmatprep.subr.mxu0 %v499
        %524 = vmatpush1.msra.mxu0 %v498
        %525 = vmatprep.subr.mxu0 0.0
        %526 = vmatpush1.msra.mxu0 0.0
        %527 = vmatprep.subr.mxu0 0.0
        %528 = vmatpush1.msra.mxu0 0.0
        %529 = vmatprep.subr.mxu0 0.0
        %530 = vmatpush1.msra.mxu0 0.0
        %531 = vmatprep.subr.mxu0 0.0
        %532 = vmatpush1.msra.mxu0 0.0
        %533 = vmatprep.subr.mxu0 0.0
        %534 = vmatpush1.msra.mxu0 0.0
        %535 = vmatprep.subr.mxu0 0.0
        %536 = vmatpush1.msra.mxu0 0.0
        %537 = vmatprep.subr.mxu0 0.0
        %538 = vmatpush1.msra.mxu0 0.0
        %539 = vmatprep.subr.mxu0 0.0
        %540 = vmatpush1.msra.mxu0 0.0
        %541 = vmatprep.subr.mxu0 0.0
        %542 = vmatpush1.msra.mxu0 0.0
        %543 = vmatprep.subr.mxu0 0.0
        %544 = vmatpush1.msra.mxu0 0.0
        %545 = vmatprep.subr.mxu0 0.0
        %546 = vmatpush1.msra.mxu0 0.0
        %547 = vmatprep.subr.mxu0 0.0
        %548 = vmatpush1.msra.mxu0 0.0
        %549 = vmatprep.subr.mxu0 0.0
        %550 = vmatpush1.msra.mxu0 0.0
        %551 = vmatprep.subr.mxu0 0.0
        %552 = vmatpush1.msra.mxu0 0.0
        %553 = vmatprep.subr.mxu0 0.0
        %554 = vmatpush1.msra.mxu0 0.0
        %555 = vmatprep.subr.mxu0 0.0
        %556 = vmatpush1.msra.mxu0 0.0
        %557 = vmatprep.subr.mxu0 0.0
        %558 = vmatpush1.msra.mxu0 0.0
        %559 = vmatprep.subr.mxu0 0.0
        %560 = vmatpush1.msra.mxu0 0.0
        %561 = vmatprep.subr.mxu0 0.0
        %562 = vmatpush1.msra.mxu0 0.0
        %563 = vmatprep.subr.mxu0 0.0
        %564 = vmatpush1.msra.mxu0 0.0
        %565 = vmatprep.subr.mxu0 0.0
        %566 = vmatpush1.msra.mxu0 0.0
        %567 = vmatprep.subr.mxu0 0.0
        %568 = vmatpush1.msra.mxu0 0.0
        %569 = vmatprep.subr.mxu0 0.0
        %570 = vmatpush1.msra.mxu0 0.0
        %571 = vmatprep.subr.mxu0 0.0
        %572 = vmatpush1.msra.mxu0 0.0
        %573 = vmatprep.subr.mxu0 0.0
        %574 = vmatpush1.msra.mxu0 0.0
        %575 = vmatprep.subr.mxu0 0.0
        %576 = vmatpush1.msra.mxu0 0.0
        %577 = vmatprep.subr.mxu0 0.0
        %578 = vmatpush1.msra.mxu0 0.0
        %579 = vmatprep.subr.mxu0 0.0
        %580 = vmatpush1.msra.mxu0 0.0
        %581 = vmatprep.mubr.f32.mxu0 0.0
        %582 = vmatmul.mubr.f32.gmra.mrb[0].mxu0 %v515
        %v583 = vpop.f32.mrb[0].mxu0
        %v584 = vadd.f32 %v506, %v583
        %v585 = vpop.f32.mrb[0].mxu0
        %v586 = vadd.f32 %v510, %v585
        %587 = vdwg.mxu0
        %588 = vst [vmem:[%s358] sm:$0xff] %v584
        %589 = vst [vmem:[%s358 + $0x8] sm:$0xff] %v586
        %s590 = sand.u32 %s209, 1
        %s591 = scalar_lea.sflag [#allocation5], %s590
        %s592 = sand.u32 %s209, 1
        %s593 = smul.addr %s592, 16
        %s594 = scalar_lea.vmem [#allocation9], %s593
        // Predicated region
        $region65: #{tpu_custom_call.1} parent=47 // pred_check
          %p595 = pneg %p219
        $region66: #{tpu_custom_call.1} parent=47 // pred_check_branch
          %597 = sbr.rel (%p595) target = $region68
        $region67: #{tpu_custom_call.1} parent=47 // pred_region
          %s598 = smul.u32 2, %s30
          %s600 = ssub.s32 256, 256
          %601 = vsyncadd %s591, %s600
          %s602 = smul.addr %s29, 2
          %s603 = sadd.s32 %s598, %s602
          %s604 = smul.addr %s603, 128
          %s605 = scalar_lea.hbm %s7, %s604
          %s607 = sshll.u32 %s594, 4
          %s608 = int_to_ptr.vmem [resolvable:$true] %s607
          %610 = dma.vmem_to_hbm [thread:$0]  %s608, 256, %s605, %s591
        $region68: #{tpu_custom_call.1} parent=47 // pred_fallthru
          _
      $region48: #{tpu_custom_call.1} parent=5 // pred_fallthru
        _
      %p611 = scmp.le.s32.totalorder 2, %s20
      // Predicated region
      $region69: #{tpu_custom_call.1} parent=5 // pred_check
        %p612 = pneg %p611
      $region70: #{tpu_custom_call.1} parent=5 // pred_check_branch
        %614 = sbr.rel (%p612) target = $region72
      $region71: #{tpu_custom_call.1} parent=5 // pred_region
        %s615 = ssub.s32 %s20, 2
        // Predicated region
        $region73: #{tpu_custom_call.1} parent=71 // pred_check
          %p616 = pneg %p225
        $region74: #{tpu_custom_call.1} parent=71 // pred_check_branch
          %618 = sbr.rel (%p616) target = $region76
        $region75: #{tpu_custom_call.1} parent=71 // pred_region
          %s619 = sand.u32 %s210, 1
          %s620 = scalar_lea.sflag [#allocation5], %s619
          %s621 = sand.u32 %s210, 1
          %s622 = smul.addr %s621, 16
          %s623 = scalar_lea.vmem [#allocation9], %s622
          %624 = dma.done %s620, 256
        $region76: #{tpu_custom_call.1} parent=71 // pred_fallthru
          _
      $region72: #{tpu_custom_call.1} parent=5 // pred_fallthru
        _
    $region6: #{tpu_custom_call.1} parent=1 // loop_footer
      %s24 = sadd.s32 1, %s20
    $region7: #{tpu_custom_call.1} parent=1 // loop_footer_branch
      %19 = sbr.rel target = $region3
    $region8: #{tpu_custom_call.1} parent=1 // loop_exit
      _
    %625 = vsyncpa [#allocation4], 1
    %s626 = scalar_lea.sflag [#allocation4], 1
    %627 = vsyncpa %s626, 1
    %628 = vsyncpa [#allocation7], 1
    %629 = vsyncpa [#allocation5], 1
    %s630 = scalar_lea.sflag [#allocation5], 1
    %631 = vsyncpa %s630, 1

</llo_original>
